<compile_context>
chip_gen: v7x
topology: tpu7x:2x2x1
jax: 0.10.0
libtpu: 0.0.40
codegen_flags: <defaults>
</compile_context>

<pallas_src>
import functools

import jax
import jax.numpy as jnp
from jax import lax
from jax.experimental import pallas as pl
from jax.experimental.pallas import tpu as pltpu

_F32 = jnp.float32
_TINY = 1e-30  # guards rsqrt for exactly/near-zero (e.g. batch-padding) columns


def _qr_panels_kernel(at_ref, qt_ref, *, panel_width):
    """Blocked CGS2 QR on transposed tiles.

    at_ref / qt_ref: (bt, N, M) with M >= N.  Row j is column j of the matrix
    being factorized, so column reads/writes are cheap sublane-row slices and
    the lane axis is the long dimension M.
    """
    n = at_ref.shape[1]
    num_panels = -(-n // panel_width)

    # Static Python loop over panels: offsets/sizes are compile-time constants,
    # so all slices below are static.
    # TODO(synk): for very large N switch the panel loop to lax.fori_loop with
    # pl.ds slices (masked qdone) to bound generated code size.
    for p in range(num_panels):
        j0 = p * panel_width
        pw = min(panel_width, n - j0)

        # f32 working copy of the current panel of columns.
        w = at_ref[:, j0:j0 + pw, :].astype(_F32)               # (bt, pw, M)

        if j0 > 0:
            # Project the panel against all previously finished Q columns,
            # twice (CGS2) for robustness.  Both contractions are batched
            # GEMMs -> MXU; qdone is read straight back out of the output
            # block resident in VMEM.
            qdone = qt_ref[:, :j0, :].astype(_F32)               # (bt, j0, M)
            for _ in range(2):
                c = jnp.einsum("bpm,bkm->bpk", w, qdone,
                               preferred_element_type=_F32)      # (bt, pw, j0)
                w = w - jnp.einsum("bpk,bkm->bpm", c, qdone,
                                   preferred_element_type=_F32)

        # Intra-panel modified Gram-Schmidt, fully unrolled (pw is small and
        # static) so the LLO scheduler can interleave adjacent columns.
        # diag(R) = ||v|| >= 0 by construction == the module's sign-fixed Q.
        # NOTE: for rank-deficient / extremely ill-conditioned inputs MGS+CGS2
        # in f32 will diverge from Householder QR; fine for reparametrization
        # weights.
        if pw > 1:
            col_ids = lax.broadcasted_iota(jnp.int32, (1, pw, 1), 1)
        for jj in range(pw):
            v = w[:, jj:jj + 1, :]                               # (bt, 1, M)
            ss = jnp.sum(v * v, axis=2, keepdims=True)           # (bt, 1, 1)
            inv = jnp.where(ss > _TINY, lax.rsqrt(ss), 0.0)      # EUP rsqrt
            qj = v * inv                                         # (bt, 1, M)
            qt_ref[:, j0 + jj:j0 + jj + 1, :] = qj.astype(qt_ref.dtype)
            if jj + 1 < pw:
                # MGS update of the trailing panel columns (masked so the
                # already-finished ones are untouched).
                coef = jnp.sum(qj * w, axis=2, keepdims=True)    # (bt, pw, 1)
                keep = (col_ids > jj).astype(_F32)
                w = w - (coef * keep) * qj


def _pick_block_batch(b, n, m, itemsize, max_block_batch=None):
    """VMEM-aware batch-tile size.

    Per batch element we hold the double-buffered input and output blocks plus
    roughly two f32 working copies (panel + finished-Q read).  Budget ~32 MiB
    of a 48 MiB scoped limit: leaves headroom on v7x (64 MiB/TC) and is far
    below v5e/v6e's 128 MiB physical.
    """
    per = 2 * 2 * n * m * itemsize + 2 * n * m * 4
    bt = max(1, (32 * 1024 * 1024) // per)
    if max_block_batch is not None:
        bt = min(bt, int(max_block_batch))
    # Keep at least two grid steps so ("parallel",) can use both v7x TCs.
    bt = max(1, min(bt, (b + 1) // 2, b))
    # Prefer a divisor of b (within 2x) so no grid step wastes time fully
    # factorizing zero-padded matrices.
    for cand in range(bt, max(1, bt // 2) - 1, -1):
        if b % cand == 0:
            return cand
    return bt


def batched_qr_orthogonalization(w, *, panel_width=None, max_block_batch=None):
    """Q of the reduced QR of w with sign(diag(R)) folded in (module semantics)."""
    if w.ndim < 2:
        raise ValueError("expected at least a 2-D weight matrix")
    orig_dtype = w.dtype

    # The module transposes "wide" matrices so rows >= cols, factorizes, and
    # transposes back.  The kernel always consumes A^T (columns on sublanes,
    # the long axis M on lanes), so wide inputs are already in kernel layout
    # and tall inputs get one swapaxes in/out (plain XLA transposes).
    wide = w.shape[-2] < w.shape[-1]
    at = w if wide else jnp.swapaxes(w, -1, -2)              # (..., N, M), M >= N

    batch_shape = at.shape[:-2]
    n, m = at.shape[-2], at.shape[-1]
    b = 1
    for d in batch_shape:
        b *= d
    at3 = at.reshape(b, n, m)

    if panel_width is None:
        panel_width = 16   # multiple of 8; bump to 64/128 for very wide N
    panel_width = int(max(1, min(panel_width, n)))

    bt = _pick_block_batch(b, n, m, jnp.dtype(orig_dtype).itemsize,
                           max_block_batch)
    b_pad = pl.cdiv(b, bt) * bt
    if b_pad != b:
        # Padded zero matrices orthogonalize to zero (guarded rsqrt); dropped.
        at3 = jnp.pad(at3, ((0, b_pad - b), (0, 0), (0, 0)))

    kernel = functools.partial(_qr_panels_kernel, panel_width=panel_width)
    qt3 = pl.pallas_call(
        kernel,
        out_shape=jax.ShapeDtypeStruct((b_pad, n, m), orig_dtype),
        grid_spec=pltpu.PrefetchScalarGridSpec(
            num_scalar_prefetch=0,
            grid=(b_pad // bt,),
            in_specs=[pl.BlockSpec((bt, n, m), lambda i: (i, 0, 0))],
            out_specs=pl.BlockSpec((bt, n, m), lambda i: (i, 0, 0)),
        ),
        compiler_params=pltpu.CompilerParams(
            dimension_semantics=("parallel",),
            vmem_limit_bytes=48 * 1024 * 1024,
        ),
    )(at3)

    qt = qt3[:b].reshape(*batch_shape, n, m)
    return qt if wide else jnp.swapaxes(qt, -1, -2)


def _reference_qr(w):
    """Pure-JAX mirror of the PyTorch module's forward."""
    transpose = w.shape[-2] < w.shape[-1]
    if transpose:
        w = jnp.swapaxes(w, -1, -2)
    q, r = jnp.linalg.qr(w, mode="reduced")
    diag_sign = jnp.sign(jnp.diagonal(r, axis1=-2, axis2=-1))[..., None, :]
    q = q * diag_sign
    if transpose:
        q = jnp.swapaxes(q, -1, -2)
    return q


if __name__ == "__main__":
    key = jax.random.PRNGKey(0)
    k1, k2, k3, k4 = jax.random.split(key, 4)
    cases = [
        # tall, panel_width=8 -> two panels, exercises the MXU (CGS2) path
        (jax.random.normal(k1, (2, 32, 16), dtype=jnp.float32),
         dict(panel_width=8)),
        # wide -> transpose branch; kernel layout == input layout
        (jax.random.normal(k2, (2, 8, 32), dtype=jnp.float32), {}),
        # ragged last panel (24 cols, default panel 16), batch of 3
        (jax.random.normal(k3, (3, 48, 24), dtype=jnp.float32), {}),
        # unbatched 2-D weight
        (jax.random.normal(k4, (24, 16), dtype=jnp.float32), {}),
    ]

    for w, kw in cases:
        q = jax.block_until_ready(batched_qr_orthogonalization(w, **kw))
        ref = _reference_qr(w)
        assert q.shape == w.shape and q.dtype == w.dtype
        assert jnp.allclose(q, ref, atol=1e-4, rtol=1e-4), \
            float(jnp.max(jnp.abs(q - ref)))
        # Orthonormality of the reduced factor.
        if w.shape[-2] >= w.shape[-1]:
            g = jnp.einsum("...mi,...mj->...ij", q, q)
        else:
            g = jnp.einsum("...im,...jm->...ij", q, q)
        eye = jnp.eye(g.shape[-1], dtype=g.dtype)
        assert jnp.allclose(g, eye, atol=1e-4)

    print("KERNEL_OK")
</pallas_src>

<mosaic_0001>
module attributes {stable_mosaic.version = 11 : i64} {
  func.func @_qr_panels_kernel(%arg0: i32, %arg1: memref<1x16x32xf32, #tpu.memory_space<vmem>>, %arg2: memref<1x16x32xf32, #tpu.memory_space<vmem>>) attributes {dimension_semantics = [#tpu.dimension_semantics<parallel>], iteration_bounds = array<i64: 2>, scalar_prefetch = 0 : i64, scratch_operands = 0 : i64, tpu.core_type = #tpu.core_type<tc>, window_params = [{transform_indices = @transform_0, window_bounds = array<i64: 1, 16, 32>}, {transform_indices = @transform_1, window_bounds = array<i64: 1, 16, 32>}]} {
    %c0 = arith.constant 0 : index
    %c0_0 = arith.constant 0 : index
    %c0_1 = arith.constant 0 : index
    %0 = vector.load %arg1[%c0, %c0_0, %c0_1] : memref<1x16x32xf32, #tpu.memory_space<vmem>>, vector<1x8x32xf32>
    %1 = tpu.iota {dimensions = array<i32: 1>} : vector<1x8x1xi32>
    %2 = vector.extract_strided_slice %0 {offsets = [0, 0, 0], sizes = [1, 1, 32], strides = [1, 1, 1]} : vector<1x8x32xf32> to vector<1x1x32xf32>
    %3 = arith.mulf %2, %2 : vector<1x1x32xf32>
    %cst = arith.constant dense<0.000000e+00> : vector<1x1xf32>
    %4 = vector.multi_reduction <add>, %3, %cst [2] : vector<1x1x32xf32> to vector<1x1xf32>
    %5 = vector.shape_cast %4 : vector<1x1xf32> to vector<1x1x1xf32>
    %cst_2 = arith.constant 1.000000e-30 : f32
    %6 = vector.broadcast %cst_2 : f32 to vector<1x1x1xf32>
    %7 = arith.cmpf ogt, %5, %6 : vector<1x1x1xf32>
    %8 = math.rsqrt %5 : vector<1x1x1xf32>
    %cst_3 = arith.constant 0.000000e+00 : f32
    %9 = vector.broadcast %cst_3 : f32 to vector<1x1x1xf32>
    %10 = arith.select %7, %8, %9 : vector<1x1x1xi1>, vector<1x1x1xf32>
    %11 = vector.broadcast %10 : vector<1x1x1xf32> to vector<1x1x32xf32>
    %12 = arith.mulf %2, %11 : vector<1x1x32xf32>
    %c0_4 = arith.constant 0 : index
    %c0_5 = arith.constant 0 : index
    %c0_6 = arith.constant 0 : index
    %13 = vector.load %arg2[%c0_4, %c0_5, %c0_6] : memref<1x16x32xf32, #tpu.memory_space<vmem>>, vector<1x1x32xf32>
    tpu.vector_store %arg2[%c0_4, %c0_5, %c0_6], %12 {strides = array<i32>} : memref<1x16x32xf32, #tpu.memory_space<vmem>>, vector<1x1x32xf32>,
    %14 = vector.broadcast %12 : vector<1x1x32xf32> to vector<1x8x32xf32>
    %15 = arith.mulf %14, %0 : vector<1x8x32xf32>
    %cst_7 = arith.constant dense<0.000000e+00> : vector<1x8xf32>
    %16 = vector.multi_reduction <add>, %15, %cst_7 [2] : vector<1x8x32xf32> to vector<1x8xf32>
    %17 = vector.shape_cast %16 : vector<1x8xf32> to vector<1x8x1xf32>
    %c0_i32 = arith.constant 0 : i32
    %18 = vector.broadcast %c0_i32 : i32 to vector<1x8x1xi32>
    %19 = arith.cmpi sgt, %1, %18 : vector<1x8x1xi32>
    %20 = arith.extui %19 : vector<1x8x1xi1> to vector<1x8x1xi32>
    %21 = arith.sitofp %20 : vector<1x8x1xi32> to vector<1x8x1xf32>
    %22 = arith.mulf %17, %21 : vector<1x8x1xf32>
    %23 = vector.broadcast %22 : vector<1x8x1xf32> to vector<1x8x32xf32>
    %24 = vector.broadcast %12 : vector<1x1x32xf32> to vector<1x8x32xf32>
    %25 = arith.mulf %23, %24 : vector<1x8x32xf32>
    %26 = arith.subf %0, %25 : vector<1x8x32xf32>
    %27 = vector.extract_strided_slice %26 {offsets = [0, 1, 0], sizes = [1, 1, 32], strides = [1, 1, 1]} : vector<1x8x32xf32> to vector<1x1x32xf32>
    %28 = arith.mulf %27, %27 : vector<1x1x32xf32>
    %cst_8 = arith.constant dense<0.000000e+00> : vector<1x1xf32>
    %29 = vector.multi_reduction <add>, %28, %cst_8 [2] : vector<1x1x32xf32> to vector<1x1xf32>
    %30 = vector.shape_cast %29 : vector<1x1xf32> to vector<1x1x1xf32>
    %cst_9 = arith.constant 1.000000e-30 : f32
    %31 = vector.broadcast %cst_9 : f32 to vector<1x1x1xf32>
    %32 = arith.cmpf ogt, %30, %31 : vector<1x1x1xf32>
    %33 = math.rsqrt %30 : vector<1x1x1xf32>
    %cst_10 = arith.constant 0.000000e+00 : f32
    %34 = vector.broadcast %cst_10 : f32 to vector<1x1x1xf32>
    %35 = arith.select %32, %33, %34 : vector<1x1x1xi1>, vector<1x1x1xf32>
    %36 = vector.broadcast %35 : vector<1x1x1xf32> to vector<1x1x32xf32>
    %37 = arith.mulf %27, %36 : vector<1x1x32xf32>
    %c0_11 = arith.constant 0 : index
    %c1 = arith.constant 1 : index
    %c0_12 = arith.constant 0 : index
    %38 = vector.load %arg2[%c0_11, %c1, %c0_12] : memref<1x16x32xf32, #tpu.memory_space<vmem>>, vector<1x1x32xf32>
    tpu.vector_store %arg2[%c0_11, %c1, %c0_12], %37 {strides = array<i32>} : memref<1x16x32xf32, #tpu.memory_space<vmem>>, vector<1x1x32xf32>,
    %39 = vector.broadcast %37 : vector<1x1x32xf32> to vector<1x8x32xf32>
    %40 = arith.mulf %39, %26 : vector<1x8x32xf32>
    %cst_13 = arith.constant dense<0.000000e+00> : vector<1x8xf32>
    %41 = vector.multi_reduction <add>, %40, %cst_13 [2] : vector<1x8x32xf32> to vector<1x8xf32>
    %42 = vector.shape_cast %41 : vector<1x8xf32> to vector<1x8x1xf32>
    %c1_i32 = arith.constant 1 : i32
    %43 = vector.broadcast %c1_i32 : i32 to vector<1x8x1xi32>
    %44 = arith.cmpi sgt, %1, %43 : vector<1x8x1xi32>
    %45 = arith.extui %44 : vector<1x8x1xi1> to vector<1x8x1xi32>
    %46 = arith.sitofp %45 : vector<1x8x1xi32> to vector<1x8x1xf32>
    %47 = arith.mulf %42, %46 : vector<1x8x1xf32>
    %48 = vector.broadcast %47 : vector<1x8x1xf32> to vector<1x8x32xf32>
    %49 = vector.broadcast %37 : vector<1x1x32xf32> to vector<1x8x32xf32>
    %50 = arith.mulf %48, %49 : vector<1x8x32xf32>
    %51 = arith.subf %26, %50 : vector<1x8x32xf32>
    %52 = vector.extract_strided_slice %51 {offsets = [0, 2, 0], sizes = [1, 1, 32], strides = [1, 1, 1]} : vector<1x8x32xf32> to vector<1x1x32xf32>
    %53 = arith.mulf %52, %52 : vector<1x1x32xf32>
    %cst_14 = arith.constant dense<0.000000e+00> : vector<1x1xf32>
    %54 = vector.multi_reduction <add>, %53, %cst_14 [2] : vector<1x1x32xf32> to vector<1x1xf32>
    %55 = vector.shape_cast %54 : vector<1x1xf32> to vector<1x1x1xf32>
    %cst_15 = arith.constant 1.000000e-30 : f32
    %56 = vector.broadcast %cst_15 : f32 to vector<1x1x1xf32>
    %57 = arith.cmpf ogt, %55, %56 : vector<1x1x1xf32>
    %58 = math.rsqrt %55 : vector<1x1x1xf32>
    %cst_16 = arith.constant 0.000000e+00 : f32
    %59 = vector.broadcast %cst_16 : f32 to vector<1x1x1xf32>
    %60 = arith.select %57, %58, %59 : vector<1x1x1xi1>, vector<1x1x1xf32>
    %61 = vector.broadcast %60 : vector<1x1x1xf32> to vector<1x1x32xf32>
    %62 = arith.mulf %52, %61 : vector<1x1x32xf32>
    %c0_17 = arith.constant 0 : index
    %c2 = arith.constant 2 : index
    %c0_18 = arith.constant 0 : index
    %63 = vector.load %arg2[%c0_17, %c2, %c0_18] : memref<1x16x32xf32, #tpu.memory_space<vmem>>, vector<1x1x32xf32>
    tpu.vector_store %arg2[%c0_17, %c2, %c0_18], %62 {strides = array<i32>} : memref<1x16x32xf32, #tpu.memory_space<vmem>>, vector<1x1x32xf32>,
    %64 = vector.broadcast %62 : vector<1x1x32xf32> to vector<1x8x32xf32>
    %65 = arith.mulf %64, %51 : vector<1x8x32xf32>
    %cst_19 = arith.constant dense<0.000000e+00> : vector<1x8xf32>
    %66 = vector.multi_reduction <add>, %65, %cst_19 [2] : vector<1x8x32xf32> to vector<1x8xf32>
    %67 = vector.shape_cast %66 : vector<1x8xf32> to vector<1x8x1xf32>
    %c2_i32 = arith.constant 2 : i32
    %68 = vector.broadcast %c2_i32 : i32 to vector<1x8x1xi32>
    %69 = arith.cmpi sgt, %1, %68 : vector<1x8x1xi32>
    %70 = arith.extui %69 : vector<1x8x1xi1> to vector<1x8x1xi32>
    %71 = arith.sitofp %70 : vector<1x8x1xi32> to vector<1x8x1xf32>
    %72 = arith.mulf %67, %71 : vector<1x8x1xf32>
    %73 = vector.broadcast %72 : vector<1x8x1xf32> to vector<1x8x32xf32>
    %74 = vector.broadcast %62 : vector<1x1x32xf32> to vector<1x8x32xf32>
    %75 = arith.mulf %73, %74 : vector<1x8x32xf32>
    %76 = arith.subf %51, %75 : vector<1x8x32xf32>
    %77 = vector.extract_strided_slice %76 {offsets = [0, 3, 0], sizes = [1, 1, 32], strides = [1, 1, 1]} : vector<1x8x32xf32> to vector<1x1x32xf32>
    %78 = arith.mulf %77, %77 : vector<1x1x32xf32>
    %cst_20 = arith.constant dense<0.000000e+00> : vector<1x1xf32>
    %79 = vector.multi_reduction <add>, %78, %cst_20 [2] : vector<1x1x32xf32> to vector<1x1xf32>
    %80 = vector.shape_cast %79 : vector<1x1xf32> to vector<1x1x1xf32>
    %cst_21 = arith.constant 1.000000e-30 : f32
    %81 = vector.broadcast %cst_21 : f32 to vector<1x1x1xf32>
    %82 = arith.cmpf ogt, %80, %81 : vector<1x1x1xf32>
    %83 = math.rsqrt %80 : vector<1x1x1xf32>
    %cst_22 = arith.constant 0.000000e+00 : f32
    %84 = vector.broadcast %cst_22 : f32 to vector<1x1x1xf32>
    %85 = arith.select %82, %83, %84 : vector<1x1x1xi1>, vector<1x1x1xf32>
    %86 = vector.broadcast %85 : vector<1x1x1xf32> to vector<1x1x32xf32>
    %87 = arith.mulf %77, %86 : vector<1x1x32xf32>
    %c0_23 = arith.constant 0 : index
    %c3 = arith.constant 3 : index
    %c0_24 = arith.constant 0 : index
    %88 = vector.load %arg2[%c0_23, %c3, %c0_24] : memref<1x16x32xf32, #tpu.memory_space<vmem>>, vector<1x1x32xf32>
    tpu.vector_store %arg2[%c0_23, %c3, %c0_24], %87 {strides = array<i32>} : memref<1x16x32xf32, #tpu.memory_space<vmem>>, vector<1x1x32xf32>,
    %89 = vector.broadcast %87 : vector<1x1x32xf32> to vector<1x8x32xf32>
    %90 = arith.mulf %89, %76 : vector<1x8x32xf32>
    %cst_25 = arith.constant dense<0.000000e+00> : vector<1x8xf32>
    %91 = vector.multi_reduction <add>, %90, %cst_25 [2] : vector<1x8x32xf32> to vector<1x8xf32>
    %92 = vector.shape_cast %91 : vector<1x8xf32> to vector<1x8x1xf32>
    %c3_i32 = arith.constant 3 : i32
    %93 = vector.broadcast %c3_i32 : i32 to vector<1x8x1xi32>
    %94 = arith.cmpi sgt, %1, %93 : vector<1x8x1xi32>
    %95 = arith.extui %94 : vector<1x8x1xi1> to vector<1x8x1xi32>
    %96 = arith.sitofp %95 : vector<1x8x1xi32> to vector<1x8x1xf32>
    %97 = arith.mulf %92, %96 : vector<1x8x1xf32>
    %98 = vector.broadcast %97 : vector<1x8x1xf32> to vector<1x8x32xf32>
    %99 = vector.broadcast %87 : vector<1x1x32xf32> to vector<1x8x32xf32>
    %100 = arith.mulf %98, %99 : vector<1x8x32xf32>
    %101 = arith.subf %76, %100 : vector<1x8x32xf32>
    %102 = vector.extract_strided_slice %101 {offsets = [0, 4, 0], sizes = [1, 1, 32], strides = [1, 1, 1]} : vector<1x8x32xf32> to vector<1x1x32xf32>
    %103 = arith.mulf %102, %102 : vector<1x1x32xf32>
    %cst_26 = arith.constant dense<0.000000e+00> : vector<1x1xf32>
    %104 = vector.multi_reduction <add>, %103, %cst_26 [2] : vector<1x1x32xf32> to vector<1x1xf32>
    %105 = vector.shape_cast %104 : vector<1x1xf32> to vector<1x1x1xf32>
    %cst_27 = arith.constant 1.000000e-30 : f32
    %106 = vector.broadcast %cst_27 : f32 to vector<1x1x1xf32>
    %107 = arith.cmpf ogt, %105, %106 : vector<1x1x1xf32>
    %108 = math.rsqrt %105 : vector<1x1x1xf32>
    %cst_28 = arith.constant 0.000000e+00 : f32
    %109 = vector.broadcast %cst_28 : f32 to vector<1x1x1xf32>
    %110 = arith.select %107, %108, %109 : vector<1x1x1xi1>, vector<1x1x1xf32>
    %111 = vector.broadcast %110 : vector<1x1x1xf32> to vector<1x1x32xf32>
    %112 = arith.mulf %102, %111 : vector<1x1x32xf32>
    %c0_29 = arith.constant 0 : index
    %c4 = arith.constant 4 : index
    %c0_30 = arith.constant 0 : index
    %113 = vector.load %arg2[%c0_29, %c4, %c0_30] : memref<1x16x32xf32, #tpu.memory_space<vmem>>, vector<1x1x32xf32>
    tpu.vector_store %arg2[%c0_29, %c4, %c0_30], %112 {strides = array<i32>} : memref<1x16x32xf32, #tpu.memory_space<vmem>>, vector<1x1x32xf32>,
    %114 = vector.broadcast %112 : vector<1x1x32xf32> to vector<1x8x32xf32>
    %115 = arith.mulf %114, %101 : vector<1x8x32xf32>
    %cst_31 = arith.constant dense<0.000000e+00> : vector<1x8xf32>
    %116 = vector.multi_reduction <add>, %115, %cst_31 [2] : vector<1x8x32xf32> to vector<1x8xf32>
    %117 = vector.shape_cast %116 : vector<1x8xf32> to vector<1x8x1xf32>
    %c4_i32 = arith.constant 4 : i32
    %118 = vector.broadcast %c4_i32 : i32 to vector<1x8x1xi32>
    %119 = arith.cmpi sgt, %1, %118 : vector<1x8x1xi32>
    %120 = arith.extui %119 : vector<1x8x1xi1> to vector<1x8x1xi32>
    %121 = arith.sitofp %120 : vector<1x8x1xi32> to vector<1x8x1xf32>
    %122 = arith.mulf %117, %121 : vector<1x8x1xf32>
    %123 = vector.broadcast %122 : vector<1x8x1xf32> to vector<1x8x32xf32>
    %124 = vector.broadcast %112 : vector<1x1x32xf32> to vector<1x8x32xf32>
    %125 = arith.mulf %123, %124 : vector<1x8x32xf32>
    %126 = arith.subf %101, %125 : vector<1x8x32xf32>
    %127 = vector.extract_strided_slice %126 {offsets = [0, 5, 0], sizes = [1, 1, 32], strides = [1, 1, 1]} : vector<1x8x32xf32> to vector<1x1x32xf32>
    %128 = arith.mulf %127, %127 : vector<1x1x32xf32>
    %cst_32 = arith.constant dense<0.000000e+00> : vector<1x1xf32>
    %129 = vector.multi_reduction <add>, %128, %cst_32 [2] : vector<1x1x32xf32> to vector<1x1xf32>
    %130 = vector.shape_cast %129 : vector<1x1xf32> to vector<1x1x1xf32>
    %cst_33 = arith.constant 1.000000e-30 : f32
    %131 = vector.broadcast %cst_33 : f32 to vector<1x1x1xf32>
    %132 = arith.cmpf ogt, %130, %131 : vector<1x1x1xf32>
    %133 = math.rsqrt %130 : vector<1x1x1xf32>
    %cst_34 = arith.constant 0.000000e+00 : f32
    %134 = vector.broadcast %cst_34 : f32 to vector<1x1x1xf32>
    %135 = arith.select %132, %133, %134 : vector<1x1x1xi1>, vector<1x1x1xf32>
    %136 = vector.broadcast %135 : vector<1x1x1xf32> to vector<1x1x32xf32>
    %137 = arith.mulf %127, %136 : vector<1x1x32xf32>
    %c0_35 = arith.constant 0 : index
    %c5 = arith.constant 5 : index
    %c0_36 = arith.constant 0 : index
    %138 = vector.load %arg2[%c0_35, %c5, %c0_36] : memref<1x16x32xf32, #tpu.memory_space<vmem>>, vector<1x1x32xf32>
    tpu.vector_store %arg2[%c0_35, %c5, %c0_36], %137 {strides = array<i32>} : memref<1x16x32xf32, #tpu.memory_space<vmem>>, vector<1x1x32xf32>,
    %139 = vector.broadcast %137 : vector<1x1x32xf32> to vector<1x8x32xf32>
    %140 = arith.mulf %139, %126 : vector<1x8x32xf32>
    %cst_37 = arith.constant dense<0.000000e+00> : vector<1x8xf32>
    %141 = vector.multi_reduction <add>, %140, %cst_37 [2] : vector<1x8x32xf32> to vector<1x8xf32>
    %142 = vector.shape_cast %141 : vector<1x8xf32> to vector<1x8x1xf32>
    %c5_i32 = arith.constant 5 : i32
    %143 = vector.broadcast %c5_i32 : i32 to vector<1x8x1xi32>
    %144 = arith.cmpi sgt, %1, %143 : vector<1x8x1xi32>
    %145 = arith.extui %144 : vector<1x8x1xi1> to vector<1x8x1xi32>
    %146 = arith.sitofp %145 : vector<1x8x1xi32> to vector<1x8x1xf32>
    %147 = arith.mulf %142, %146 : vector<1x8x1xf32>
    %148 = vector.broadcast %147 : vector<1x8x1xf32> to vector<1x8x32xf32>
    %149 = vector.broadcast %137 : vector<1x1x32xf32> to vector<1x8x32xf32>
    %150 = arith.mulf %148, %149 : vector<1x8x32xf32>
    %151 = arith.subf %126, %150 : vector<1x8x32xf32>
    %152 = vector.extract_strided_slice %151 {offsets = [0, 6, 0], sizes = [1, 1, 32], strides = [1, 1, 1]} : vector<1x8x32xf32> to vector<1x1x32xf32>
    %153 = arith.mulf %152, %152 : vector<1x1x32xf32>
    %cst_38 = arith.constant dense<0.000000e+00> : vector<1x1xf32>
    %154 = vector.multi_reduction <add>, %153, %cst_38 [2] : vector<1x1x32xf32> to vector<1x1xf32>
    %155 = vector.shape_cast %154 : vector<1x1xf32> to vector<1x1x1xf32>
    %cst_39 = arith.constant 1.000000e-30 : f32
    %156 = vector.broadcast %cst_39 : f32 to vector<1x1x1xf32>
    %157 = arith.cmpf ogt, %155, %156 : vector<1x1x1xf32>
    %158 = math.rsqrt %155 : vector<1x1x1xf32>
    %cst_40 = arith.constant 0.000000e+00 : f32
    %159 = vector.broadcast %cst_40 : f32 to vector<1x1x1xf32>
    %160 = arith.select %157, %158, %159 : vector<1x1x1xi1>, vector<1x1x1xf32>
    %161 = vector.broadcast %160 : vector<1x1x1xf32> to vector<1x1x32xf32>
    %162 = arith.mulf %152, %161 : vector<1x1x32xf32>
    %c0_41 = arith.constant 0 : index
    %c6 = arith.constant 6 : index
    %c0_42 = arith.constant 0 : index
    %163 = vector.load %arg2[%c0_41, %c6, %c0_42] : memref<1x16x32xf32, #tpu.memory_space<vmem>>, vector<1x1x32xf32>
    tpu.vector_store %arg2[%c0_41, %c6, %c0_42], %162 {strides = array<i32>} : memref<1x16x32xf32, #tpu.memory_space<vmem>>, vector<1x1x32xf32>,
    %164 = vector.broadcast %162 : vector<1x1x32xf32> to vector<1x8x32xf32>
    %165 = arith.mulf %164, %151 : vector<1x8x32xf32>
    %cst_43 = arith.constant dense<0.000000e+00> : vector<1x8xf32>
    %166 = vector.multi_reduction <add>, %165, %cst_43 [2] : vector<1x8x32xf32> to vector<1x8xf32>
    %167 = vector.shape_cast %166 : vector<1x8xf32> to vector<1x8x1xf32>
    %c6_i32 = arith.constant 6 : i32
    %168 = vector.broadcast %c6_i32 : i32 to vector<1x8x1xi32>
    %169 = arith.cmpi sgt, %1, %168 : vector<1x8x1xi32>
    %170 = arith.extui %169 : vector<1x8x1xi1> to vector<1x8x1xi32>
    %171 = arith.sitofp %170 : vector<1x8x1xi32> to vector<1x8x1xf32>
    %172 = arith.mulf %167, %171 : vector<1x8x1xf32>
    %173 = vector.broadcast %172 : vector<1x8x1xf32> to vector<1x8x32xf32>
    %174 = vector.broadcast %162 : vector<1x1x32xf32> to vector<1x8x32xf32>
    %175 = arith.mulf %173, %174 : vector<1x8x32xf32>
    %176 = arith.subf %151, %175 : vector<1x8x32xf32>
    %177 = vector.extract_strided_slice %176 {offsets = [0, 7, 0], sizes = [1, 1, 32], strides = [1, 1, 1]} : vector<1x8x32xf32> to vector<1x1x32xf32>
    %178 = arith.mulf %177, %177 : vector<1x1x32xf32>
    %cst_44 = arith.constant dense<0.000000e+00> : vector<1x1xf32>
    %179 = vector.multi_reduction <add>, %178, %cst_44 [2] : vector<1x1x32xf32> to vector<1x1xf32>
    %180 = vector.shape_cast %179 : vector<1x1xf32> to vector<1x1x1xf32>
    %cst_45 = arith.constant 1.000000e-30 : f32
    %181 = vector.broadcast %cst_45 : f32 to vector<1x1x1xf32>
    %182 = arith.cmpf ogt, %180, %181 : vector<1x1x1xf32>
    %183 = math.rsqrt %180 : vector<1x1x1xf32>
    %cst_46 = arith.constant 0.000000e+00 : f32
    %184 = vector.broadcast %cst_46 : f32 to vector<1x1x1xf32>
    %185 = arith.select %182, %183, %184 : vector<1x1x1xi1>, vector<1x1x1xf32>
    %186 = vector.broadcast %185 : vector<1x1x1xf32> to vector<1x1x32xf32>
    %187 = arith.mulf %177, %186 : vector<1x1x32xf32>
    %c0_47 = arith.constant 0 : index
    %c7 = arith.constant 7 : index
    %c0_48 = arith.constant 0 : index
    %188 = vector.load %arg2[%c0_47, %c7, %c0_48] : memref<1x16x32xf32, #tpu.memory_space<vmem>>, vector<1x1x32xf32>
    tpu.vector_store %arg2[%c0_47, %c7, %c0_48], %187 {strides = array<i32>} : memref<1x16x32xf32, #tpu.memory_space<vmem>>, vector<1x1x32xf32>,
    %c0_49 = arith.constant 0 : index
    %c8 = arith.constant 8 : index
    %c0_50 = arith.constant 0 : index
    %189 = vector.load %arg1[%c0_49, %c8, %c0_50] : memref<1x16x32xf32, #tpu.memory_space<vmem>>, vector<1x8x32xf32>
    %c0_51 = arith.constant 0 : index
    %c0_52 = arith.constant 0 : index
    %c0_53 = arith.constant 0 : index
    %190 = vector.load %arg2[%c0_51, %c0_52, %c0_53] : memref<1x16x32xf32, #tpu.memory_space<vmem>>, vector<1x8x32xf32>
    "tpu.trace_start"() <{level = 10 : i32, message = "bpm,bkm->bpk"}> : () -> ()
    %cst_54 = arith.constant dense<0.000000e+00> : vector<1x8x8xf32>
    %191 = tpu.matmul %189, %190, %cst_54 {dimension_numbers = #tpu.dot_dimension_numbers<[2], [2], [1], [1], [0, 0, 0, 1, 1, 1], [0], [0]>} : vector<1x8x32xf32>, vector<1x8x32xf32>, vector<1x8x8xf32> -> vector<1x8x8xf32>
    "tpu.trace_stop"() : () -> ()
    "tpu.trace_start"() <{level = 10 : i32, message = "bpk,bkm->bpm"}> : () -> ()
    %cst_55 = arith.constant dense<0.000000e+00> : vector<1x8x32xf32>
    %192 = tpu.matmul %191, %190, %cst_55 {dimension_numbers = #tpu.dot_dimension_numbers<[2], [1], [1], [2], [0, 0, 0, 1, 1, 2], [0], [0]>} : vector<1x8x8xf32>, vector<1x8x32xf32>, vector<1x8x32xf32> -> vector<1x8x32xf32>
    "tpu.trace_stop"() : () -> ()
    %193 = arith.subf %189, %192 : vector<1x8x32xf32>
    "tpu.trace_start"() <{level = 10 : i32, message = "bpm,bkm->bpk"}> : () -> ()
    %cst_56 = arith.constant dense<0.000000e+00> : vector<1x8x8xf32>
    %194 = tpu.matmul %193, %190, %cst_56 {dimension_numbers = #tpu.dot_dimension_numbers<[2], [2], [1], [1], [0, 0, 0, 1, 1, 1], [0], [0]>} : vector<1x8x32xf32>, vector<1x8x32xf32>, vector<1x8x8xf32> -> vector<1x8x8xf32>
    "tpu.trace_stop"() : () -> ()
    "tpu.trace_start"() <{level = 10 : i32, message = "bpk,bkm->bpm"}> : () -> ()
    %cst_57 = arith.constant dense<0.000000e+00> : vector<1x8x32xf32>
    %195 = tpu.matmul %194, %190, %cst_57 {dimension_numbers = #tpu.dot_dimension_numbers<[2], [1], [1], [2], [0, 0, 0, 1, 1, 2], [0], [0]>} : vector<1x8x8xf32>, vector<1x8x32xf32>, vector<1x8x32xf32> -> vector<1x8x32xf32>
    "tpu.trace_stop"() : () -> ()
    %196 = arith.subf %193, %195 : vector<1x8x32xf32>
    %197 = tpu.iota {dimensions = array<i32: 1>} : vector<1x8x1xi32>
    %198 = vector.extract_strided_slice %196 {offsets = [0, 0, 0], sizes = [1, 1, 32], strides = [1, 1, 1]} : vector<1x8x32xf32> to vector<1x1x32xf32>
    %199 = arith.mulf %198, %198 : vector<1x1x32xf32>
    %cst_58 = arith.constant dense<0.000000e+00> : vector<1x1xf32>
    %200 = vector.multi_reduction <add>, %199, %cst_58 [2] : vector<1x1x32xf32> to vector<1x1xf32>
    %201 = vector.shape_cast %200 : vector<1x1xf32> to vector<1x1x1xf32>
    %cst_59 = arith.constant 1.000000e-30 : f32
    %202 = vector.broadcast %cst_59 : f32 to vector<1x1x1xf32>
    %203 = arith.cmpf ogt, %201, %202 : vector<1x1x1xf32>
    %204 = math.rsqrt %201 : vector<1x1x1xf32>
    %cst_60 = arith.constant 0.000000e+00 : f32
    %205 = vector.broadcast %cst_60 : f32 to vector<1x1x1xf32>
    %206 = arith.select %203, %204, %205 : vector<1x1x1xi1>, vector<1x1x1xf32>
    %207 = vector.broadcast %206 : vector<1x1x1xf32> to vector<1x1x32xf32>
    %208 = arith.mulf %198, %207 : vector<1x1x32xf32>
    %c0_61 = arith.constant 0 : index
    %c8_62 = arith.constant 8 : index
    %c0_63 = arith.constant 0 : index
    %209 = vector.load %arg2[%c0_61, %c8_62, %c0_63] : memref<1x16x32xf32, #tpu.memory_space<vmem>>, vector<1x1x32xf32>
    tpu.vector_store %arg2[%c0_61, %c8_62, %c0_63], %208 {strides = array<i32>} : memref<1x16x32xf32, #tpu.memory_space<vmem>>, vector<1x1x32xf32>,
    %210 = vector.broadcast %208 : vector<1x1x32xf32> to vector<1x8x32xf32>
    %211 = arith.mulf %210, %196 : vector<1x8x32xf32>
    %cst_64 = arith.constant dense<0.000000e+00> : vector<1x8xf32>
    %212 = vector.multi_reduction <add>, %211, %cst_64 [2] : vector<1x8x32xf32> to vector<1x8xf32>
    %213 = vector.shape_cast %212 : vector<1x8xf32> to vector<1x8x1xf32>
    %c0_i32_65 = arith.constant 0 : i32
    %214 = vector.broadcast %c0_i32_65 : i32 to vector<1x8x1xi32>
    %215 = arith.cmpi sgt, %197, %214 : vector<1x8x1xi32>
    %216 = arith.extui %215 : vector<1x8x1xi1> to vector<1x8x1xi32>
    %217 = arith.sitofp %216 : vector<1x8x1xi32> to vector<1x8x1xf32>
    %218 = arith.mulf %213, %217 : vector<1x8x1xf32>
    %219 = vector.broadcast %218 : vector<1x8x1xf32> to vector<1x8x32xf32>
    %220 = vector.broadcast %208 : vector<1x1x32xf32> to vector<1x8x32xf32>
    %221 = arith.mulf %219, %220 : vector<1x8x32xf32>
    %222 = arith.subf %196, %221 : vector<1x8x32xf32>
    %223 = vector.extract_strided_slice %222 {offsets = [0, 1, 0], sizes = [1, 1, 32], strides = [1, 1, 1]} : vector<1x8x32xf32> to vector<1x1x32xf32>
    %224 = arith.mulf %223, %223 : vector<1x1x32xf32>
    %cst_66 = arith.constant dense<0.000000e+00> : vector<1x1xf32>
    %225 = vector.multi_reduction <add>, %224, %cst_66 [2] : vector<1x1x32xf32> to vector<1x1xf32>
    %226 = vector.shape_cast %225 : vector<1x1xf32> to vector<1x1x1xf32>
    %cst_67 = arith.constant 1.000000e-30 : f32
    %227 = vector.broadcast %cst_67 : f32 to vector<1x1x1xf32>
    %228 = arith.cmpf ogt, %226, %227 : vector<1x1x1xf32>
    %229 = math.rsqrt %226 : vector<1x1x1xf32>
    %cst_68 = arith.constant 0.000000e+00 : f32
    %230 = vector.broadcast %cst_68 : f32 to vector<1x1x1xf32>
    %231 = arith.select %228, %229, %230 : vector<1x1x1xi1>, vector<1x1x1xf32>
    %232 = vector.broadcast %231 : vector<1x1x1xf32> to vector<1x1x32xf32>
    %233 = arith.mulf %223, %232 : vector<1x1x32xf32>
    %c0_69 = arith.constant 0 : index
    %c9 = arith.constant 9 : index
    %c0_70 = arith.constant 0 : index
    %234 = vector.load %arg2[%c0_69, %c9, %c0_70] : memref<1x16x32xf32, #tpu.memory_space<vmem>>, vector<1x1x32xf32>
    tpu.vector_store %arg2[%c0_69, %c9, %c0_70], %233 {strides = array<i32>} : memref<1x16x32xf32, #tpu.memory_space<vmem>>, vector<1x1x32xf32>,
    %235 = vector.broadcast %233 : vector<1x1x32xf32> to vector<1x8x32xf32>
    %236 = arith.mulf %235, %222 : vector<1x8x32xf32>
    %cst_71 = arith.constant dense<0.000000e+00> : vector<1x8xf32>
    %237 = vector.multi_reduction <add>, %236, %cst_71 [2] : vector<1x8x32xf32> to vector<1x8xf32>
    %238 = vector.shape_cast %237 : vector<1x8xf32> to vector<1x8x1xf32>
    %c1_i32_72 = arith.constant 1 : i32
    %239 = vector.broadcast %c1_i32_72 : i32 to vector<1x8x1xi32>
    %240 = arith.cmpi sgt, %197, %239 : vector<1x8x1xi32>
    %241 = arith.extui %240 : vector<1x8x1xi1> to vector<1x8x1xi32>
    %242 = arith.sitofp %241 : vector<1x8x1xi32> to vector<1x8x1xf32>
    %243 = arith.mulf %238, %242 : vector<1x8x1xf32>
    %244 = vector.broadcast %243 : vector<1x8x1xf32> to vector<1x8x32xf32>
    %245 = vector.broadcast %233 : vector<1x1x32xf32> to vector<1x8x32xf32>
    %246 = arith.mulf %244, %245 : vector<1x8x32xf32>
    %247 = arith.subf %222, %246 : vector<1x8x32xf32>
    %248 = vector.extract_strided_slice %247 {offsets = [0, 2, 0], sizes = [1, 1, 32], strides = [1, 1, 1]} : vector<1x8x32xf32> to vector<1x1x32xf32>
    %249 = arith.mulf %248, %248 : vector<1x1x32xf32>
    %cst_73 = arith.constant dense<0.000000e+00> : vector<1x1xf32>
    %250 = vector.multi_reduction <add>, %249, %cst_73 [2] : vector<1x1x32xf32> to vector<1x1xf32>
    %251 = vector.shape_cast %250 : vector<1x1xf32> to vector<1x1x1xf32>
    %cst_74 = arith.constant 1.000000e-30 : f32
    %252 = vector.broadcast %cst_74 : f32 to vector<1x1x1xf32>
    %253 = arith.cmpf ogt, %251, %252 : vector<1x1x1xf32>
    %254 = math.rsqrt %251 : vector<1x1x1xf32>
    %cst_75 = arith.constant 0.000000e+00 : f32
    %255 = vector.broadcast %cst_75 : f32 to vector<1x1x1xf32>
    %256 = arith.select %253, %254, %255 : vector<1x1x1xi1>, vector<1x1x1xf32>
    %257 = vector.broadcast %256 : vector<1x1x1xf32> to vector<1x1x32xf32>
    %258 = arith.mulf %248, %257 : vector<1x1x32xf32>
    %c0_76 = arith.constant 0 : index
    %c10 = arith.constant 10 : index
    %c0_77 = arith.constant 0 : index
    %259 = vector.load %arg2[%c0_76, %c10, %c0_77] : memref<1x16x32xf32, #tpu.memory_space<vmem>>, vector<1x1x32xf32>
    tpu.vector_store %arg2[%c0_76, %c10, %c0_77], %258 {strides = array<i32>} : memref<1x16x32xf32, #tpu.memory_space<vmem>>, vector<1x1x32xf32>,
    %260 = vector.broadcast %258 : vector<1x1x32xf32> to vector<1x8x32xf32>
    %261 = arith.mulf %260, %247 : vector<1x8x32xf32>
    %cst_78 = arith.constant dense<0.000000e+00> : vector<1x8xf32>
    %262 = vector.multi_reduction <add>, %261, %cst_78 [2] : vector<1x8x32xf32> to vector<1x8xf32>
    %263 = vector.shape_cast %262 : vector<1x8xf32> to vector<1x8x1xf32>
    %c2_i32_79 = arith.constant 2 : i32
    %264 = vector.broadcast %c2_i32_79 : i32 to vector<1x8x1xi32>
    %265 = arith.cmpi sgt, %197, %264 : vector<1x8x1xi32>
    %266 = arith.extui %265 : vector<1x8x1xi1> to vector<1x8x1xi32>
    %267 = arith.sitofp %266 : vector<1x8x1xi32> to vector<1x8x1xf32>
    %268 = arith.mulf %263, %267 : vector<1x8x1xf32>
    %269 = vector.broadcast %268 : vector<1x8x1xf32> to vector<1x8x32xf32>
    %270 = vector.broadcast %258 : vector<1x1x32xf32> to vector<1x8x32xf32>
    %271 = arith.mulf %269, %270 : vector<1x8x32xf32>
    %272 = arith.subf %247, %271 : vector<1x8x32xf32>
    %273 = vector.extract_strided_slice %272 {offsets = [0, 3, 0], sizes = [1, 1, 32], strides = [1, 1, 1]} : vector<1x8x32xf32> to vector<1x1x32xf32>
    %274 = arith.mulf %273, %273 : vector<1x1x32xf32>
    %cst_80 = arith.constant dense<0.000000e+00> : vector<1x1xf32>
    %275 = vector.multi_reduction <add>, %274, %cst_80 [2] : vector<1x1x32xf32> to vector<1x1xf32>
    %276 = vector.shape_cast %275 : vector<1x1xf32> to vector<1x1x1xf32>
    %cst_81 = arith.constant 1.000000e-30 : f32
    %277 = vector.broadcast %cst_81 : f32 to vector<1x1x1xf32>
    %278 = arith.cmpf ogt, %276, %277 : vector<1x1x1xf32>
    %279 = math.rsqrt %276 : vector<1x1x1xf32>
    %cst_82 = arith.constant 0.000000e+00 : f32
    %280 = vector.broadcast %cst_82 : f32 to vector<1x1x1xf32>
    %281 = arith.select %278, %279, %280 : vector<1x1x1xi1>, vector<1x1x1xf32>
    %282 = vector.broadcast %281 : vector<1x1x1xf32> to vector<1x1x32xf32>
    %283 = arith.mulf %273, %282 : vector<1x1x32xf32>
    %c0_83 = arith.constant 0 : index
    %c11 = arith.constant 11 : index
    %c0_84 = arith.constant 0 : index
    %284 = vector.load %arg2[%c0_83, %c11, %c0_84] : memref<1x16x32xf32, #tpu.memory_space<vmem>>, vector<1x1x32xf32>
    tpu.vector_store %arg2[%c0_83, %c11, %c0_84], %283 {strides = array<i32>} : memref<1x16x32xf32, #tpu.memory_space<vmem>>, vector<1x1x32xf32>,
    %285 = vector.broadcast %283 : vector<1x1x32xf32> to vector<1x8x32xf32>
    %286 = arith.mulf %285, %272 : vector<1x8x32xf32>
    %cst_85 = arith.constant dense<0.000000e+00> : vector<1x8xf32>
    %287 = vector.multi_reduction <add>, %286, %cst_85 [2] : vector<1x8x32xf32> to vector<1x8xf32>
    %288 = vector.shape_cast %287 : vector<1x8xf32> to vector<1x8x1xf32>
    %c3_i32_86 = arith.constant 3 : i32
    %289 = vector.broadcast %c3_i32_86 : i32 to vector<1x8x1xi32>
    %290 = arith.cmpi sgt, %197, %289 : vector<1x8x1xi32>
    %291 = arith.extui %290 : vector<1x8x1xi1> to vector<1x8x1xi32>
    %292 = arith.sitofp %291 : vector<1x8x1xi32> to vector<1x8x1xf32>
    %293 = arith.mulf %288, %292 : vector<1x8x1xf32>
    %294 = vector.broadcast %293 : vector<1x8x1xf32> to vector<1x8x32xf32>
    %295 = vector.broadcast %283 : vector<1x1x32xf32> to vector<1x8x32xf32>
    %296 = arith.mulf %294, %295 : vector<1x8x32xf32>
    %297 = arith.subf %272, %296 : vector<1x8x32xf32>
    %298 = vector.extract_strided_slice %297 {offsets = [0, 4, 0], sizes = [1, 1, 32], strides = [1, 1, 1]} : vector<1x8x32xf32> to vector<1x1x32xf32>
    %299 = arith.mulf %298, %298 : vector<1x1x32xf32>
    %cst_87 = arith.constant dense<0.000000e+00> : vector<1x1xf32>
    %300 = vector.multi_reduction <add>, %299, %cst_87 [2] : vector<1x1x32xf32> to vector<1x1xf32>
    %301 = vector.shape_cast %300 : vector<1x1xf32> to vector<1x1x1xf32>
    %cst_88 = arith.constant 1.000000e-30 : f32
    %302 = vector.broadcast %cst_88 : f32 to vector<1x1x1xf32>
    %303 = arith.cmpf ogt, %301, %302 : vector<1x1x1xf32>
    %304 = math.rsqrt %301 : vector<1x1x1xf32>
    %cst_89 = arith.constant 0.000000e+00 : f32
    %305 = vector.broadcast %cst_89 : f32 to vector<1x1x1xf32>
    %306 = arith.select %303, %304, %305 : vector<1x1x1xi1>, vector<1x1x1xf32>
    %307 = vector.broadcast %306 : vector<1x1x1xf32> to vector<1x1x32xf32>
    %308 = arith.mulf %298, %307 : vector<1x1x32xf32>
    %c0_90 = arith.constant 0 : index
    %c12 = arith.constant 12 : index
    %c0_91 = arith.constant 0 : index
    %309 = vector.load %arg2[%c0_90, %c12, %c0_91] : memref<1x16x32xf32, #tpu.memory_space<vmem>>, vector<1x1x32xf32>
    tpu.vector_store %arg2[%c0_90, %c12, %c0_91], %308 {strides = array<i32>} : memref<1x16x32xf32, #tpu.memory_space<vmem>>, vector<1x1x32xf32>,
    %310 = vector.broadcast %308 : vector<1x1x32xf32> to vector<1x8x32xf32>
    %311 = arith.mulf %310, %297 : vector<1x8x32xf32>
    %cst_92 = arith.constant dense<0.000000e+00> : vector<1x8xf32>
    %312 = vector.multi_reduction <add>, %311, %cst_92 [2] : vector<1x8x32xf32> to vector<1x8xf32>
    %313 = vector.shape_cast %312 : vector<1x8xf32> to vector<1x8x1xf32>
    %c4_i32_93 = arith.constant 4 : i32
    %314 = vector.broadcast %c4_i32_93 : i32 to vector<1x8x1xi32>
    %315 = arith.cmpi sgt, %197, %314 : vector<1x8x1xi32>
    %316 = arith.extui %315 : vector<1x8x1xi1> to vector<1x8x1xi32>
    %317 = arith.sitofp %316 : vector<1x8x1xi32> to vector<1x8x1xf32>
    %318 = arith.mulf %313, %317 : vector<1x8x1xf32>
    %319 = vector.broadcast %318 : vector<1x8x1xf32> to vector<1x8x32xf32>
    %320 = vector.broadcast %308 : vector<1x1x32xf32> to vector<1x8x32xf32>
    %321 = arith.mulf %319, %320 : vector<1x8x32xf32>
    %322 = arith.subf %297, %321 : vector<1x8x32xf32>
    %323 = vector.extract_strided_slice %322 {offsets = [0, 5, 0], sizes = [1, 1, 32], strides = [1, 1, 1]} : vector<1x8x32xf32> to vector<1x1x32xf32>
    %324 = arith.mulf %323, %323 : vector<1x1x32xf32>
    %cst_94 = arith.constant dense<0.000000e+00> : vector<1x1xf32>
    %325 = vector.multi_reduction <add>, %324, %cst_94 [2] : vector<1x1x32xf32> to vector<1x1xf32>
    %326 = vector.shape_cast %325 : vector<1x1xf32> to vector<1x1x1xf32>
    %cst_95 = arith.constant 1.000000e-30 : f32
    %327 = vector.broadcast %cst_95 : f32 to vector<1x1x1xf32>
    %328 = arith.cmpf ogt, %326, %327 : vector<1x1x1xf32>
    %329 = math.rsqrt %326 : vector<1x1x1xf32>
    %cst_96 = arith.constant 0.000000e+00 : f32
    %330 = vector.broadcast %cst_96 : f32 to vector<1x1x1xf32>
    %331 = arith.select %328, %329, %330 : vector<1x1x1xi1>, vector<1x1x1xf32>
    %332 = vector.broadcast %331 : vector<1x1x1xf32> to vector<1x1x32xf32>
    %333 = arith.mulf %323, %332 : vector<1x1x32xf32>
    %c0_97 = arith.constant 0 : index
    %c13 = arith.constant 13 : index
    %c0_98 = arith.constant 0 : index
    %334 = vector.load %arg2[%c0_97, %c13, %c0_98] : memref<1x16x32xf32, #tpu.memory_space<vmem>>, vector<1x1x32xf32>
    tpu.vector_store %arg2[%c0_97, %c13, %c0_98], %333 {strides = array<i32>} : memref<1x16x32xf32, #tpu.memory_space<vmem>>, vector<1x1x32xf32>,
    %335 = vector.broadcast %333 : vector<1x1x32xf32> to vector<1x8x32xf32>
    %336 = arith.mulf %335, %322 : vector<1x8x32xf32>
    %cst_99 = arith.constant dense<0.000000e+00> : vector<1x8xf32>
    %337 = vector.multi_reduction <add>, %336, %cst_99 [2] : vector<1x8x32xf32> to vector<1x8xf32>
    %338 = vector.shape_cast %337 : vector<1x8xf32> to vector<1x8x1xf32>
    %c5_i32_100 = arith.constant 5 : i32
    %339 = vector.broadcast %c5_i32_100 : i32 to vector<1x8x1xi32>
    %340 = arith.cmpi sgt, %197, %339 : vector<1x8x1xi32>
    %341 = arith.extui %340 : vector<1x8x1xi1> to vector<1x8x1xi32>
    %342 = arith.sitofp %341 : vector<1x8x1xi32> to vector<1x8x1xf32>
    %343 = arith.mulf %338, %342 : vector<1x8x1xf32>
    %344 = vector.broadcast %343 : vector<1x8x1xf32> to vector<1x8x32xf32>
    %345 = vector.broadcast %333 : vector<1x1x32xf32> to vector<1x8x32xf32>
    %346 = arith.mulf %344, %345 : vector<1x8x32xf32>
    %347 = arith.subf %322, %346 : vector<1x8x32xf32>
    %348 = vector.extract_strided_slice %347 {offsets = [0, 6, 0], sizes = [1, 1, 32], strides = [1, 1, 1]} : vector<1x8x32xf32> to vector<1x1x32xf32>
    %349 = arith.mulf %348, %348 : vector<1x1x32xf32>
    %cst_101 = arith.constant dense<0.000000e+00> : vector<1x1xf32>
    %350 = vector.multi_reduction <add>, %349, %cst_101 [2] : vector<1x1x32xf32> to vector<1x1xf32>
    %351 = vector.shape_cast %350 : vector<1x1xf32> to vector<1x1x1xf32>
    %cst_102 = arith.constant 1.000000e-30 : f32
    %352 = vector.broadcast %cst_102 : f32 to vector<1x1x1xf32>
    %353 = arith.cmpf ogt, %351, %352 : vector<1x1x1xf32>
    %354 = math.rsqrt %351 : vector<1x1x1xf32>
    %cst_103 = arith.constant 0.000000e+00 : f32
    %355 = vector.broadcast %cst_103 : f32 to vector<1x1x1xf32>
    %356 = arith.select %353, %354, %355 : vector<1x1x1xi1>, vector<1x1x1xf32>
    %357 = vector.broadcast %356 : vector<1x1x1xf32> to vector<1x1x32xf32>
    %358 = arith.mulf %348, %357 : vector<1x1x32xf32>
    %c0_104 = arith.constant 0 : index
    %c14 = arith.constant 14 : index
    %c0_105 = arith.constant 0 : index
    %359 = vector.load %arg2[%c0_104, %c14, %c0_105] : memref<1x16x32xf32, #tpu.memory_space<vmem>>, vector<1x1x32xf32>
    tpu.vector_store %arg2[%c0_104, %c14, %c0_105], %358 {strides = array<i32>} : memref<1x16x32xf32, #tpu.memory_space<vmem>>, vector<1x1x32xf32>,
    %360 = vector.broadcast %358 : vector<1x1x32xf32> to vector<1x8x32xf32>
    %361 = arith.mulf %360, %347 : vector<1x8x32xf32>
    %cst_106 = arith.constant dense<0.000000e+00> : vector<1x8xf32>
    %362 = vector.multi_reduction <add>, %361, %cst_106 [2] : vector<1x8x32xf32> to vector<1x8xf32>
    %363 = vector.shape_cast %362 : vector<1x8xf32> to vector<1x8x1xf32>
    %c6_i32_107 = arith.constant 6 : i32
    %364 = vector.broadcast %c6_i32_107 : i32 to vector<1x8x1xi32>
    %365 = arith.cmpi sgt, %197, %364 : vector<1x8x1xi32>
    %366 = arith.extui %365 : vector<1x8x1xi1> to vector<1x8x1xi32>
    %367 = arith.sitofp %366 : vector<1x8x1xi32> to vector<1x8x1xf32>
    %368 = arith.mulf %363, %367 : vector<1x8x1xf32>
    %369 = vector.broadcast %368 : vector<1x8x1xf32> to vector<1x8x32xf32>
    %370 = vector.broadcast %358 : vector<1x1x32xf32> to vector<1x8x32xf32>
    %371 = arith.mulf %369, %370 : vector<1x8x32xf32>
    %372 = arith.subf %347, %371 : vector<1x8x32xf32>
    %373 = vector.extract_strided_slice %372 {offsets = [0, 7, 0], sizes = [1, 1, 32], strides = [1, 1, 1]} : vector<1x8x32xf32> to vector<1x1x32xf32>
    %374 = arith.mulf %373, %373 : vector<1x1x32xf32>
    %cst_108 = arith.constant dense<0.000000e+00> : vector<1x1xf32>
    %375 = vector.multi_reduction <add>, %374, %cst_108 [2] : vector<1x1x32xf32> to vector<1x1xf32>
    %376 = vector.shape_cast %375 : vector<1x1xf32> to vector<1x1x1xf32>
    %cst_109 = arith.constant 1.000000e-30 : f32
    %377 = vector.broadcast %cst_109 : f32 to vector<1x1x1xf32>
    %378 = arith.cmpf ogt, %376, %377 : vector<1x1x1xf32>
    %379 = math.rsqrt %376 : vector<1x1x1xf32>
    %cst_110 = arith.constant 0.000000e+00 : f32
    %380 = vector.broadcast %cst_110 : f32 to vector<1x1x1xf32>
    %381 = arith.select %378, %379, %380 : vector<1x1x1xi1>, vector<1x1x1xf32>
    %382 = vector.broadcast %381 : vector<1x1x1xf32> to vector<1x1x32xf32>
    %383 = arith.mulf %373, %382 : vector<1x1x32xf32>
    %c0_111 = arith.constant 0 : index
    %c15 = arith.constant 15 : index
    %c0_112 = arith.constant 0 : index
    %384 = vector.load %arg2[%c0_111, %c15, %c0_112] : memref<1x16x32xf32, #tpu.memory_space<vmem>>, vector<1x1x32xf32>
    tpu.vector_store %arg2[%c0_111, %c15, %c0_112], %383 {strides = array<i32>} : memref<1x16x32xf32, #tpu.memory_space<vmem>>, vector<1x1x32xf32>,
    return
  }
  func.func @transform_0(%arg0: i32) -> (i32, i32, i32) {
    %c0_i32 = arith.constant 0 : i32
    %c0_i32_0 = arith.constant 0 : i32
    %c0_i32_1 = arith.constant 0 : i32
    return %arg0, %c0_i32, %c0_i32_0 : i32, i32, i32
  }
  func.func @transform_1(%arg0: i32) -> (i32, i32, i32) {
    %c0_i32 = arith.constant 0 : i32
    %c0_i32_0 = arith.constant 0 : i32
    %c0_i32_1 = arith.constant 0 : i32
    return %arg0, %c0_i32, %c0_i32_0 : i32, i32, i32
  }
}

</mosaic_0001>

<llo_original>
// kernel: tpu_custom_call.1
$region0: #{tpu_custom_call.1}
  #allocation0 [shape = 'u32[]', space=smem, size = 0x4, offset = 0x4, fixed_abs, tag = 'smem constant byte address 0x4 - core index']
  #allocation1 [shape = 'u32[144,128]{1,0:T(1,128)}', space=vmem, size = 0x12000, scoped, tag = 'internal scratch']
  %s0 = inlined_call_operand.hbm [shape: f32[2,16,32], index: 0, kind: input, shape index: {}]
  %s1 = inlined_call_operand.hbm [shape: f32[2,16,32], index: 1, kind: output, shape index: {}]
  %s2 = sld [smem:[#allocation0]]
  $region41: #{tpu_custom_call.1} parent=0
    _
  %s4 = ssub.s32 1, %s2
  %s5 = scalar_select 0, %s4, %s2
  $region1: #{tpu_custom_call.1} parent=0
    #allocation2 [shape = 'u8[16384]{0}', space=vmem, size = 0x4000, scoped, tag = 'input window, operand 0']
    #allocation3 [shape = 's32[2]{0}', space=sflag, size = 0x8, scoped, tag = 'scoped memory for tpu_custom_call.1']
    #allocation4 [shape = 's32[2]{0}', space=sflag, size = 0x8, scoped, tag = 'scoped memory for tpu_custom_call.1']
    #allocation5 [shape = 'u8[16384]{0}', space=vmem, size = 0x4000, scoped, tag = 'output window, operand 0']
    %6 = vsyncpa [#allocation3], 0
    %s7 = scalar_lea.sflag [#allocation3], 1
    %8 = vsyncpa %s7, 0
    %9 = vsyncpa [#allocation4], 0
    %s10 = scalar_lea.sflag [#allocation4], 1
    %11 = vsyncpa %s10, 0
    loop: start=0, step=1, limit=4
    $region2: #{tpu_custom_call.1} parent=1 // loop_pre_header
      _
    $region3: #{tpu_custom_call.1} parent=1 // loop_header
      %s13 = sphi 0, %s17
      %p14 = scmp.ge.s32.totalorder %s13, 4
      %s23 = sphi 0, %s25
      %s26 = sphi 0, %s23
      %s27 = sphi 0, %s26
      %s43 = sphi 0, %s27
      %s49 = sphi 0, %s51
      %s52 = sphi 0, %s49
      %s53 = sphi 0, %s52
      %s69 = sphi 0, %s53
    $region4: #{tpu_custom_call.1} parent=1 // loop_header_branch
      %16 = sbr.rel (%p14) target = $region8
    $region5: #{tpu_custom_call.1} parent=1 // loop_body
      %s18 = ssub.s32 %s13, 1
      %s19 = ssub.s32 %s13, 2
      %s20 = sadd.s32 %s13, 1
      %s21 = ssub.s32 %s13, %s20
      %p22 = scmp.eq.s32.totalorder %s21, 0
      %s24 = sadd.s32 %s23, 1
      %s25 = scalar_select %p22, %s23, %s24
      %p28 = pneg %p22
      %p29 = scmp.eq.s32.totalorder %s13, 1
      %p30 = por %p28, %p29
      %p31 = scmp.ne.s32.totalorder %s23, %s26
      %p32 = scmp.eq.s32.totalorder %s13, 0
      %p33 = por %p31, %p32
      %p34 = scmp.ne.s32.totalorder %s23, %s26
      %p35 = scmp.eq.s32.totalorder %s18, 1
      %p36 = por %p34, %p35
      %p37 = scmp.ne.s32.totalorder %s26, %s27
      %p38 = scmp.eq.s32.totalorder %s18, 0
      %p39 = por %p37, %p38
      %p40 = scmp.ne.s32.totalorder %s26, %s27
      %p41 = scmp.eq.s32.totalorder %s19, 1
      %p42 = por %p40, %p41
      %p44 = scmp.ne.s32.totalorder %s27, %s43
      %p45 = scmp.eq.s32.totalorder %s19, 0
      %p46 = por %p44, %p45
      %s47 = ssub.s32 %s13, %s20
      %p48 = scmp.eq.s32.totalorder %s47, 0
      %s50 = sadd.s32 %s49, 1
      %s51 = scalar_select %p48, %s49, %s50
      %p54 = pneg %p48
      %p55 = scmp.eq.s32.totalorder %s13, 1
      %p56 = por %p54, %p55
      %p57 = scmp.ne.s32.totalorder %s49, %s52
      %p58 = scmp.eq.s32.totalorder %s13, 0
      %p59 = por %p57, %p58
      %p60 = scmp.ne.s32.totalorder %s49, %s52
      %p61 = scmp.eq.s32.totalorder %s18, 1
      %p62 = por %p60, %p61
      %p63 = scmp.ne.s32.totalorder %s52, %s53
      %p64 = scmp.eq.s32.totalorder %s18, 0
      %p65 = por %p63, %p64
      %p66 = scmp.ne.s32.totalorder %s52, %s53
      %p67 = scmp.eq.s32.totalorder %s19, 1
      %p68 = por %p66, %p67
      %p70 = scmp.ne.s32.totalorder %s53, %s69
      %p71 = scmp.eq.s32.totalorder %s19, 0
      %p72 = por %p70, %p71
      %p73 = scmp.le.s32.totalorder 1, %s13
      %p74 = scmp.lt.s32.totalorder %s13, 3
      %p75 = pnand %p73, %p74
      %p76 = pneg %p75
      // Predicated region
      $region9: #{tpu_custom_call.1} parent=5 // pred_check
        _
      $region10: #{tpu_custom_call.1} parent=5 // pred_check_branch
        %78 = sbr.rel (%p75) target = $region12
      $region11: #{tpu_custom_call.1} parent=5 // pred_region
        %s79 = ssub.s32 %s13, 1
      $region12: #{tpu_custom_call.1} parent=5 // pred_fallthru
        _
      %p80 = scmp.lt.s32.totalorder %s13, 2
      // Predicated region
      $region13: #{tpu_custom_call.1} parent=5 // pred_check
        %p81 = pneg %p80
      $region14: #{tpu_custom_call.1} parent=5 // pred_check_branch
        %83 = sbr.rel (%p81) target = $region16
      $region15: #{tpu_custom_call.1} parent=5 // pred_region
        // Predicated region
        $region17: #{tpu_custom_call.1} parent=15 // pred_check
          %p84 = pneg %p33
        $region18: #{tpu_custom_call.1} parent=15 // pred_check_branch
          %86 = sbr.rel (%p84) target = $region20
        $region19: #{tpu_custom_call.1} parent=15 // pred_region
          %s87 = sand.u32 %s23, 1
          %s88 = scalar_lea.sflag [#allocation3], %s87
          %s89 = sand.u32 %s23, 1
          %s90 = smul.addr %s89, 16
          %s91 = scalar_lea.vmem [#allocation2], %s90
          %s93 = ssub.s32 256, 256
          %94 = vsyncadd %s88, %s93
          %s95 = smul.addr %s13, 2
          %s96 = smul.addr %s95, 128
          %s97 = scalar_lea.hbm %s0, %s96
          %s98 = sshll.u32 %s91, 4
          %s99 = int_to_ptr.vmem [resolvable:$true] %s98
          %104 = dma.hbm_to_vmem [thread:$0]  %s97, 256, %s99, %s88, 128, 128, 8
        $region20: #{tpu_custom_call.1} parent=15 // pred_fallthru
          _
      $region16: #{tpu_custom_call.1} parent=5 // pred_fallthru
        _
      %p105 = scmp.le.s32.totalorder 1, %s13
      %p106 = scmp.lt.s32.totalorder %s13, 3
      %p107 = pnand %p105, %p106
      %p108 = pneg %p107
      // Predicated region
      $region21: #{tpu_custom_call.1} parent=5 // pred_check
        _
      $region22: #{tpu_custom_call.1} parent=5 // pred_check_branch
        %110 = sbr.rel (%p107) target = $region24
      $region23: #{tpu_custom_call.1} parent=5 // pred_region
        %s111 = ssub.s32 %s13, 1
        %s112 = sand.u32 %s26, 1
        %s113 = scalar_lea.sflag [#allocation3], %s112
        %s114 = sand.u32 %s26, 1
        %s115 = smul.addr %s114, 16
        %s116 = scalar_lea.vmem [#allocation2], %s115
        // Predicated region
        $region25: #{tpu_custom_call.1} parent=23 // pred_check
          %p117 = pneg %p39
        $region26: #{tpu_custom_call.1} parent=23 // pred_check_branch
          %119 = sbr.rel (%p117) target = $region28
        $region27: #{tpu_custom_call.1} parent=23 // pred_region
          %120 = dma.done %s113, 256
        $region28: #{tpu_custom_call.1} parent=23 // pred_fallthru
          _
        %s121 = sand.u32 %s26, 1
        %s122 = scalar_lea.sflag [#allocation3], %s121
        %s123 = sand.u32 %s26, 1
        %s124 = smul.addr %s123, 16
        %s125 = scalar_lea.vmem [#allocation2], %s124
        %p126 = pneg %p39
        %p127 = pneg %p36
        %p128 = pneg %p65
        %p129 = pneg %p62
        %s130 = sand.u32 %s52, 1
        %s131 = scalar_lea.sflag [#allocation4], %s130
        %s132 = sand.u32 %s52, 1
        %s133 = smul.addr %s132, 16
        %s134 = scalar_lea.vmem [#allocation5], %s133
        %v135 = vld [vmem:[%s116] sm:$0xff]
        %v136 = vlaneseq
        %v137 = vshrl.u32 %v136, 7
        %v138 = vmul.f32 %v135, %v135
        %vm139 = vcmask 253952
        %v140 = vsel %vm139, %v138, 0.0
        %141 = vadd.xlane.f32.xlu0 %v140
        %v142 = vpop.xlane.xlu0 %141
        %vm143 = vcmp.gt.f32.partialorder %v142, 1e-30
        %v144 = vrsqrt.pop %v142
        %v145 = vsel %vm143, %v144, 0.0
        %v146 = vmul.f32 %v135, %v145
        %147 = vst.msk [vmem:[%s134] sm:$0x1] %vm139, %v146
        %v148 = vlaneseq
        %v149 = vshrl.u32 %v148, 7
        %v150 = vsub.s32 0, %v149
        %v151 = vrot.slane %v146, %v150
        %v152 = vmul.f32 %v151, %v135
        %vm153 = vcmask 261120
        %v154 = vsel %vm153, %v152, 0.0
        %155 = vadd.xlane.f32.xlu0 %v154
        %v156 = vpop.xlane.xlu0 %155
        %vm157 = vcmp.gt.s32.totalorder %v137, 0
        %v158 = vsel %vm157, 1, 0
        %v159 = vcvt.s32.f32 %v158
        %v160 = vmul.f32 %v156, %v159
        %v161 = vmul.f32 %v160, %v151
        %v162 = vsub.f32 %v135, %v161
        %v163 = vmul.f32 %v162, %v162
        %vm164 = vcmask 254977
        %v165 = vsel %vm164, %v163, 0.0
        %166 = vadd.xlane.f32.xlu0 %v165
        %v167 = vpop.xlane.xlu0 %166
        %vm168 = vcmp.gt.f32.partialorder %v167, 1e-30
        %v169 = vrsqrt.pop %v167
        %v170 = vsel %vm168, %v169, 0.0
        %v171 = vmul.f32 %v162, %v170
        %172 = vst.msk [vmem:[%s134] sm:$0x2] %vm164, %v171
        %v173 = vlaneseq
        %v174 = vshrl.u32 %v173, 7
        %v175 = vsub.s32 1, %v174
        %v176 = vrot.slane %v171, %v175
        %v177 = vmul.f32 %v176, %v162
        %v178 = vsel %vm153, %v177, 0.0
        %179 = vadd.xlane.f32.xlu0 %v178
        %v180 = vpop.xlane.xlu0 %179
        %vm181 = vcmp.gt.s32.totalorder %v137, 1
        %v182 = vsel %vm181, 1, 0
        %v183 = vcvt.s32.f32 %v182
        %v184 = vmul.f32 %v180, %v183
        %v185 = vmul.f32 %v184, %v176
        %v186 = vsub.f32 %v162, %v185
        %v187 = vmul.f32 %v186, %v186
        %vm188 = vcmask 256002
        %v189 = vsel %vm188, %v187, 0.0
        %190 = vadd.xlane.f32.xlu0 %v189
        %v191 = vpop.xlane.xlu0 %190
        %vm192 = vcmp.gt.f32.partialorder %v191, 1e-30
        %v193 = vrsqrt.pop %v191
        %v194 = vsel %vm192, %v193, 0.0
        %v195 = vmul.f32 %v186, %v194
        %196 = vst.msk [vmem:[%s134] sm:$0x4] %vm188, %v195
        %v197 = vlaneseq
        %v198 = vshrl.u32 %v197, 7
        %v199 = vsub.s32 2, %v198
        %v200 = vrot.slane %v195, %v199
        %v201 = vmul.f32 %v200, %v186
        %v202 = vsel %vm153, %v201, 0.0
        %203 = vadd.xlane.f32.xlu0 %v202
        %v204 = vpop.xlane.xlu0 %203
        %vm205 = vcmp.gt.s32.totalorder %v137, 2
        %v206 = vsel %vm205, 1, 0
        %v207 = vcvt.s32.f32 %v206
        %v208 = vmul.f32 %v204, %v207
        %v209 = vmul.f32 %v208, %v200
        %v210 = vsub.f32 %v186, %v209
        %v211 = vmul.f32 %v210, %v210
        %vm212 = vcmask 257027
        %v213 = vsel %vm212, %v211, 0.0
        %214 = vadd.xlane.f32.xlu0 %v213
        %v215 = vpop.xlane.xlu0 %214
        %vm216 = vcmp.gt.f32.partialorder %v215, 1e-30
        %v217 = vrsqrt.pop %v215
        %v218 = vsel %vm216, %v217, 0.0
        %v219 = vmul.f32 %v210, %v218
        %220 = vst.msk [vmem:[%s134] sm:$0x8] %vm212, %v219
        %v221 = vlaneseq
        %v222 = vshrl.u32 %v221, 7
        %v223 = vsub.s32 3, %v222
        %v224 = vrot.slane %v219, %v223
        %v225 = vmul.f32 %v224, %v210
        %v226 = vsel %vm153, %v225, 0.0
        %227 = vadd.xlane.f32.xlu0 %v226
        %v228 = vpop.xlane.xlu0 %227
        %vm229 = vcmp.gt.s32.totalorder %v137, 3
        %v230 = vsel %vm229, 1, 0
        %v231 = vcvt.s32.f32 %v230
        %v232 = vmul.f32 %v228, %v231
        %v233 = vmul.f32 %v232, %v224
        %v234 = vsub.f32 %v210, %v233
        %v235 = vmul.f32 %v234, %v234
        %vm236 = vcmask 258052
        %v237 = vsel %vm236, %v235, 0.0
        %238 = vadd.xlane.f32.xlu0 %v237
        %v239 = vpop.xlane.xlu0 %238
        %vm240 = vcmp.gt.f32.partialorder %v239, 1e-30
        %v241 = vrsqrt.pop %v239
        %v242 = vsel %vm240, %v241, 0.0
        %v243 = vmul.f32 %v234, %v242
        %244 = vst.msk [vmem:[%s134] sm:$0x10] %vm236, %v243
        %v245 = vlaneseq
        %v246 = vshrl.u32 %v245, 7
        %v247 = vsub.s32 4, %v246
        %v248 = vrot.slane %v243, %v247
        %v249 = vmul.f32 %v248, %v234
        %v250 = vsel %vm153, %v249, 0.0
        %251 = vadd.xlane.f32.xlu0 %v250
        %v252 = vpop.xlane.xlu0 %251
        %vm253 = vcmp.gt.s32.totalorder %v137, 4
        %v254 = vsel %vm253, 1, 0
        %v255 = vcvt.s32.f32 %v254
        %v256 = vmul.f32 %v252, %v255
        %v257 = vmul.f32 %v256, %v248
        %v258 = vsub.f32 %v234, %v257
        %v259 = vmul.f32 %v258, %v258
        %vm260 = vcmask 259077
        %v261 = vsel %vm260, %v259, 0.0
        %262 = vadd.xlane.f32.xlu0 %v261
        %v263 = vpop.xlane.xlu0 %262
        %vm264 = vcmp.gt.f32.partialorder %v263, 1e-30
        %v265 = vrsqrt.pop %v263
        %v266 = vsel %vm264, %v265, 0.0
        %v267 = vmul.f32 %v258, %v266
        %268 = vst.msk [vmem:[%s134] sm:$0x20] %vm260, %v267
        %v269 = vlaneseq
        %v270 = vshrl.u32 %v269, 7
        %v271 = vsub.s32 5, %v270
        %v272 = vrot.slane %v267, %v271
        %v273 = vmul.f32 %v272, %v258
        %v274 = vsel %vm153, %v273, 0.0
        %275 = vadd.xlane.f32.xlu0 %v274
        %v276 = vpop.xlane.xlu0 %275
        %vm277 = vcmp.gt.s32.totalorder %v137, 5
        %v278 = vsel %vm277, 1, 0
        %v279 = vcvt.s32.f32 %v278
        %v280 = vmul.f32 %v276, %v279
        %v281 = vmul.f32 %v280, %v272
        %v282 = vsub.f32 %v258, %v281
        %v283 = vmul.f32 %v282, %v282
        %vm284 = vcmask 260102
        %v285 = vsel %vm284, %v283, 0.0
        %286 = vadd.xlane.f32.xlu0 %v285
        %v287 = vpop.xlane.xlu0 %286
        %vm288 = vcmp.gt.f32.partialorder %v287, 1e-30
        %v289 = vrsqrt.pop %v287
        %v290 = vsel %vm288, %v289, 0.0
        %v291 = vmul.f32 %v282, %v290
        %292 = vst.msk [vmem:[%s134] sm:$0x40] %vm284, %v291
        %v293 = vlaneseq
        %v294 = vshrl.u32 %v293, 7
        %v295 = vsub.s32 6, %v294
        %v296 = vrot.slane %v291, %v295
        %v297 = vmul.f32 %v296, %v282
        %v298 = vsel %vm153, %v297, 0.0
        %299 = vadd.xlane.f32.xlu0 %v298
        %v300 = vpop.xlane.xlu0 %299
        %vm301 = vcmp.gt.s32.totalorder %v137, 6
        %v302 = vsel %vm301, 1, 0
        %v303 = vcvt.s32.f32 %v302
        %v304 = vmul.f32 %v300, %v303
        %v305 = vmul.f32 %v304, %v296
        %v306 = vsub.f32 %v282, %v305
        %v307 = vmul.f32 %v306, %v306
        %vm308 = vcmask 261127
        %v309 = vsel %vm308, %v307, 0.0
        %310 = vadd.xlane.f32.xlu0 %v309
        %v311 = vpop.xlane.xlu0 %310
        %vm312 = vcmp.gt.f32.partialorder %v311, 1e-30
        %v313 = vrsqrt.pop %v311
        %v314 = vsel %vm312, %v313, 0.0
        %v315 = vmul.f32 %v306, %v314
        %316 = vst.msk [vmem:[%s134] sm:$0x80] %vm308, %v315
        %v317 = vld [vmem:[%s116 + $0x8] sm:$0xff]
        %v318 = vld [vmem:[%s134] sm:$0xff]
        %v320 = vsel %vm153, %v317, 0
        %v323 = vsel %vm153, %v318, 0
        %325 = vmatprep.subr.mxu0 0.0
        %326 = vmatpush1.xpose.msra.mxu0 %v323
        %327 = vmatprep.subr.mxu0 0.0
        %328 = vmatpush1.xpose.msra.mxu0 0.0
        %329 = vmatprep.subr.mxu0 0.0
        %330 = vmatpush1.xpose.msra.mxu0 0.0
        %331 = vmatprep.subr.mxu0 0.0
        %332 = vmatpush1.xpose.msra.mxu0 0.0
        %333 = vmatprep.subr.mxu0 0.0
        %334 = vmatpush1.xpose.msra.mxu0 0.0
        %335 = vmatprep.subr.mxu0 0.0
        %336 = vmatpush1.xpose.msra.mxu0 0.0
        %337 = vmatprep.subr.mxu0 0.0
        %338 = vmatpush1.xpose.msra.mxu0 0.0
        %339 = vmatprep.subr.mxu0 0.0
        %340 = vmatpush1.xpose.msra.mxu0 0.0
        %341 = vmatprep.subr.mxu0 0.0
        %342 = vmatpush1.xpose.msra.mxu0 0.0
        %343 = vmatprep.subr.mxu0 0.0
        %344 = vmatpush1.xpose.msra.mxu0 0.0
        %345 = vmatprep.subr.mxu0 0.0
        %346 = vmatpush1.xpose.msra.mxu0 0.0
        %347 = vmatprep.subr.mxu0 0.0
        %348 = vmatpush1.xpose.msra.mxu0 0.0
        %349 = vmatprep.subr.mxu0 0.0
        %350 = vmatpush1.xpose.msra.mxu0 0.0
        %351 = vmatprep.subr.mxu0 0.0
        %352 = vmatpush1.xpose.msra.mxu0 0.0
        %353 = vmatprep.subr.mxu0 0.0
        %354 = vmatpush1.xpose.msra.mxu0 0.0
        %355 = vmatprep.subr.mxu0 0.0
        %356 = vmatpush1.xpose.msra.mxu0 0.0
        %357 = vmatprep.subr.mxu0 0.0
        %358 = vmatpush1.xpose.msra.mxu0 0.0
        %359 = vmatprep.subr.mxu0 0.0
        %360 = vmatpush1.xpose.msra.mxu0 0.0
        %361 = vmatprep.subr.mxu0 0.0
        %362 = vmatpush1.xpose.msra.mxu0 0.0
        %363 = vmatprep.subr.mxu0 0.0
        %364 = vmatpush1.xpose.msra.mxu0 0.0
        %365 = vmatprep.subr.mxu0 0.0
        %366 = vmatpush1.xpose.msra.mxu0 0.0
        %367 = vmatprep.subr.mxu0 0.0
        %368 = vmatpush1.xpose.msra.mxu0 0.0
        %369 = vmatprep.subr.mxu0 0.0
        %370 = vmatpush1.xpose.msra.mxu0 0.0
        %371 = vmatprep.subr.mxu0 0.0
        %372 = vmatpush1.xpose.msra.mxu0 0.0
        %373 = vmatprep.subr.mxu0 0.0
        %374 = vmatpush1.xpose.msra.mxu0 0.0
        %375 = vmatprep.subr.mxu0 0.0
        %376 = vmatpush1.xpose.msra.mxu0 0.0
        %377 = vmatprep.subr.mxu0 0.0
        %378 = vmatpush1.xpose.msra.mxu0 0.0
        %379 = vmatprep.subr.mxu0 0.0
        %380 = vmatpush1.xpose.msra.mxu0 0.0
        %381 = vmatprep.subr.mxu0 0.0
        %382 = vmatpush1.xpose.msra.mxu0 0.0
        %383 = vmatprep.subr.mxu0 0.0
        %384 = vmatpush1.xpose.msra.mxu0 0.0
        %385 = vmatprep.subr.mxu0 0.0
        %386 = vmatpush1.xpose.msra.mxu0 0.0
        %387 = vmatprep.subr.mxu0 0.0
        %388 = vmatpush1.xpose.msra.mxu0 0.0
        %389 = vmatprep.mubr.f32.mxu0 0.0
        %390 = vmatmul.mubr.f32.gmra.mrb[0].mxu0 %v320
        %v391 = vpop.f32.mrb[0].mxu0
        %v392 = vadd.f32 0.0, %v391
        %v393 = vpop.f32.mrb[0].mxu0
        %394 = vdwg.mxu0
        %vm395 = vcmask 64512
        %v397 = vsel %vm395, %v392, 0
        %399 = vmatprep.subr.mxu0 0.0
        %400 = vmatpush1.msra.mxu0 %v318
        %401 = vmatprep.subr.mxu0 0.0
        %402 = vmatpush1.msra.mxu0 0.0
        %403 = vmatprep.subr.mxu0 0.0
        %404 = vmatpush1.msra.mxu0 0.0
        %405 = vmatprep.subr.mxu0 0.0
        %406 = vmatpush1.msra.mxu0 0.0
        %407 = vmatprep.subr.mxu0 0.0
        %408 = vmatpush1.msra.mxu0 0.0
        %409 = vmatprep.subr.mxu0 0.0
        %410 = vmatpush1.msra.mxu0 0.0
        %411 = vmatprep.subr.mxu0 0.0
        %412 = vmatpush1.msra.mxu0 0.0
        %413 = vmatprep.subr.mxu0 0.0
        %414 = vmatpush1.msra.mxu0 0.0
        %415 = vmatprep.subr.mxu0 0.0
        %416 = vmatpush1.msra.mxu0 0.0
        %417 = vmatprep.subr.mxu0 0.0
        %418 = vmatpush1.msra.mxu0 0.0
        %419 = vmatprep.subr.mxu0 0.0
        %420 = vmatpush1.msra.mxu0 0.0
        %421 = vmatprep.subr.mxu0 0.0
        %422 = vmatpush1.msra.mxu0 0.0
        %423 = vmatprep.subr.mxu0 0.0
        %424 = vmatpush1.msra.mxu0 0.0
        %425 = vmatprep.subr.mxu0 0.0
        %426 = vmatpush1.msra.mxu0 0.0
        %427 = vmatprep.subr.mxu0 0.0
        %428 = vmatpush1.msra.mxu0 0.0
        %429 = vmatprep.subr.mxu0 0.0
        %430 = vmatpush1.msra.mxu0 0.0
        %431 = vmatprep.subr.mxu0 0.0
        %432 = vmatpush1.msra.mxu0 0.0
        %433 = vmatprep.subr.mxu0 0.0
        %434 = vmatpush1.msra.mxu0 0.0
        %435 = vmatprep.subr.mxu0 0.0
        %436 = vmatpush1.msra.mxu0 0.0
        %437 = vmatprep.subr.mxu0 0.0
        %438 = vmatpush1.msra.mxu0 0.0
        %439 = vmatprep.subr.mxu0 0.0
        %440 = vmatpush1.msra.mxu0 0.0
        %441 = vmatprep.subr.mxu0 0.0
        %442 = vmatpush1.msra.mxu0 0.0
        %443 = vmatprep.subr.mxu0 0.0
        %444 = vmatpush1.msra.mxu0 0.0
        %445 = vmatprep.subr.mxu0 0.0
        %446 = vmatpush1.msra.mxu0 0.0
        %447 = vmatprep.subr.mxu0 0.0
        %448 = vmatpush1.msra.mxu0 0.0
        %449 = vmatprep.subr.mxu0 0.0
        %450 = vmatpush1.msra.mxu0 0.0
        %451 = vmatprep.subr.mxu0 0.0
        %452 = vmatpush1.msra.mxu0 0.0
        %453 = vmatprep.subr.mxu0 0.0
        %454 = vmatpush1.msra.mxu0 0.0
        %455 = vmatprep.subr.mxu0 0.0
        %456 = vmatpush1.msra.mxu0 0.0
        %457 = vmatprep.subr.mxu0 0.0
        %458 = vmatpush1.msra.mxu0 0.0
        %459 = vmatprep.subr.mxu0 0.0
        %460 = vmatpush1.msra.mxu0 0.0
        %461 = vmatprep.subr.mxu0 0.0
        %462 = vmatpush1.msra.mxu0 0.0
        %463 = vmatprep.mubr.f32.mxu0 0.0
        %464 = vmatmul.mubr.f32.gmra.mrb[0].mxu0 %v397
        %v465 = vpop.f32.mrb[0].mxu0
        %v466 = vadd.f32 0.0, %v465
        %v467 = vpop.f32.mrb[0].mxu0
        %468 = vdwg.mxu0
        %v469 = vsub.f32 %v317, %v466
        %v471 = vsel %vm153, %v469, 0
        %473 = vmatprep.subr.mxu0 0.0
        %474 = vmatpush1.xpose.msra.mxu0 %v323
        %475 = vmatprep.subr.mxu0 0.0
        %476 = vmatpush1.xpose.msra.mxu0 0.0
        %477 = vmatprep.subr.mxu0 0.0
        %478 = vmatpush1.xpose.msra.mxu0 0.0
        %479 = vmatprep.subr.mxu0 0.0
        %480 = vmatpush1.xpose.msra.mxu0 0.0
        %481 = vmatprep.subr.mxu0 0.0
        %482 = vmatpush1.xpose.msra.mxu0 0.0
        %483 = vmatprep.subr.mxu0 0.0
        %484 = vmatpush1.xpose.msra.mxu0 0.0
        %485 = vmatprep.subr.mxu0 0.0
        %486 = vmatpush1.xpose.msra.mxu0 0.0
        %487 = vmatprep.subr.mxu0 0.0
        %488 = vmatpush1.xpose.msra.mxu0 0.0
        %489 = vmatprep.subr.mxu0 0.0
        %490 = vmatpush1.xpose.msra.mxu0 0.0
        %491 = vmatprep.subr.mxu0 0.0
        %492 = vmatpush1.xpose.msra.mxu0 0.0
        %493 = vmatprep.subr.mxu0 0.0
        %494 = vmatpush1.xpose.msra.mxu0 0.0
        %495 = vmatprep.subr.mxu0 0.0
        %496 = vmatpush1.xpose.msra.mxu0 0.0
        %497 = vmatprep.subr.mxu0 0.0
        %498 = vmatpush1.xpose.msra.mxu0 0.0
        %499 = vmatprep.subr.mxu0 0.0
        %500 = vmatpush1.xpose.msra.mxu0 0.0
        %501 = vmatprep.subr.mxu0 0.0
        %502 = vmatpush1.xpose.msra.mxu0 0.0
        %503 = vmatprep.subr.mxu0 0.0
        %504 = vmatpush1.xpose.msra.mxu0 0.0
        %505 = vmatprep.subr.mxu0 0.0
        %506 = vmatpush1.xpose.msra.mxu0 0.0
        %507 = vmatprep.subr.mxu0 0.0
        %508 = vmatpush1.xpose.msra.mxu0 0.0
        %509 = vmatprep.subr.mxu0 0.0
        %510 = vmatpush1.xpose.msra.mxu0 0.0
        %511 = vmatprep.subr.mxu0 0.0
        %512 = vmatpush1.xpose.msra.mxu0 0.0
        %513 = vmatprep.subr.mxu0 0.0
        %514 = vmatpush1.xpose.msra.mxu0 0.0
        %515 = vmatprep.subr.mxu0 0.0
        %516 = vmatpush1.xpose.msra.mxu0 0.0
        %517 = vmatprep.subr.mxu0 0.0
        %518 = vmatpush1.xpose.msra.mxu0 0.0
        %519 = vmatprep.subr.mxu0 0.0
        %520 = vmatpush1.xpose.msra.mxu0 0.0
        %521 = vmatprep.subr.mxu0 0.0
        %522 = vmatpush1.xpose.msra.mxu0 0.0
        %523 = vmatprep.subr.mxu0 0.0
        %524 = vmatpush1.xpose.msra.mxu0 0.0
        %525 = vmatprep.subr.mxu0 0.0
        %526 = vmatpush1.xpose.msra.mxu0 0.0
        %527 = vmatprep.subr.mxu0 0.0
        %528 = vmatpush1.xpose.msra.mxu0 0.0
        %529 = vmatprep.subr.mxu0 0.0
        %530 = vmatpush1.xpose.msra.mxu0 0.0
        %531 = vmatprep.subr.mxu0 0.0
        %532 = vmatpush1.xpose.msra.mxu0 0.0
        %533 = vmatprep.subr.mxu0 0.0
        %534 = vmatpush1.xpose.msra.mxu0 0.0
        %535 = vmatprep.subr.mxu0 0.0
        %536 = vmatpush1.xpose.msra.mxu0 0.0
        %537 = vmatprep.mubr.f32.mxu0 0.0
        %538 = vmatmul.mubr.f32.gmra.mrb[0].mxu0 %v471
        %v539 = vpop.f32.mrb[0].mxu0
        %v540 = vadd.f32 0.0, %v539
        %v541 = vpop.f32.mrb[0].mxu0
        %542 = vdwg.mxu0
        %v544 = vsel %vm395, %v540, 0
        %546 = vmatprep.subr.mxu0 0.0
        %547 = vmatpush1.msra.mxu0 %v318
        %548 = vmatprep.subr.mxu0 0.0
        %549 = vmatpush1.msra.mxu0 0.0
        %550 = vmatprep.subr.mxu0 0.0
        %551 = vmatpush1.msra.mxu0 0.0
        %552 = vmatprep.subr.mxu0 0.0
        %553 = vmatpush1.msra.mxu0 0.0
        %554 = vmatprep.subr.mxu0 0.0
        %555 = vmatpush1.msra.mxu0 0.0
        %556 = vmatprep.subr.mxu0 0.0
        %557 = vmatpush1.msra.mxu0 0.0
        %558 = vmatprep.subr.mxu0 0.0
        %559 = vmatpush1.msra.mxu0 0.0
        %560 = vmatprep.subr.mxu0 0.0
        %561 = vmatpush1.msra.mxu0 0.0
        %562 = vmatprep.subr.mxu0 0.0
        %563 = vmatpush1.msra.mxu0 0.0
        %564 = vmatprep.subr.mxu0 0.0
        %565 = vmatpush1.msra.mxu0 0.0
        %566 = vmatprep.subr.mxu0 0.0
        %567 = vmatpush1.msra.mxu0 0.0
        %568 = vmatprep.subr.mxu0 0.0
        %569 = vmatpush1.msra.mxu0 0.0
        %570 = vmatprep.subr.mxu0 0.0
        %571 = vmatpush1.msra.mxu0 0.0
        %572 = vmatprep.subr.mxu0 0.0
        %573 = vmatpush1.msra.mxu0 0.0
        %574 = vmatprep.subr.mxu0 0.0
        %575 = vmatpush1.msra.mxu0 0.0
        %576 = vmatprep.subr.mxu0 0.0
        %577 = vmatpush1.msra.mxu0 0.0
        %578 = vmatprep.subr.mxu0 0.0
        %579 = vmatpush1.msra.mxu0 0.0
        %580 = vmatprep.subr.mxu0 0.0
        %581 = vmatpush1.msra.mxu0 0.0
        %582 = vmatprep.subr.mxu0 0.0
        %583 = vmatpush1.msra.mxu0 0.0
        %584 = vmatprep.subr.mxu0 0.0
        %585 = vmatpush1.msra.mxu0 0.0
        %586 = vmatprep.subr.mxu0 0.0
        %587 = vmatpush1.msra.mxu0 0.0
        %588 = vmatprep.subr.mxu0 0.0
        %589 = vmatpush1.msra.mxu0 0.0
        %590 = vmatprep.subr.mxu0 0.0
        %591 = vmatpush1.msra.mxu0 0.0
        %592 = vmatprep.subr.mxu0 0.0
        %593 = vmatpush1.msra.mxu0 0.0
        %594 = vmatprep.subr.mxu0 0.0
        %595 = vmatpush1.msra.mxu0 0.0
        %596 = vmatprep.subr.mxu0 0.0
        %597 = vmatpush1.msra.mxu0 0.0
        %598 = vmatprep.subr.mxu0 0.0
        %599 = vmatpush1.msra.mxu0 0.0
        %600 = vmatprep.subr.mxu0 0.0
        %601 = vmatpush1.msra.mxu0 0.0
        %602 = vmatprep.subr.mxu0 0.0
        %603 = vmatpush1.msra.mxu0 0.0
        %604 = vmatprep.subr.mxu0 0.0
        %605 = vmatpush1.msra.mxu0 0.0
        %606 = vmatprep.subr.mxu0 0.0
        %607 = vmatpush1.msra.mxu0 0.0
        %608 = vmatprep.subr.mxu0 0.0
        %609 = vmatpush1.msra.mxu0 0.0
        %610 = vmatprep.mubr.f32.mxu0 0.0
        %611 = vmatmul.mubr.f32.gmra.mrb[0].mxu0 %v544
        %v612 = vpop.f32.mrb[0].mxu0
        %v613 = vadd.f32 0.0, %v612
        %v614 = vpop.f32.mrb[0].mxu0
        %615 = vdwg.mxu0
        %v616 = vsub.f32 %v469, %v613
        %v617 = vmul.f32 %v616, %v616
        %v618 = vsel %vm139, %v617, 0.0
        %619 = vadd.xlane.f32.xlu0 %v618
        %v620 = vpop.xlane.xlu0 %619
        %vm621 = vcmp.gt.f32.partialorder %v620, 1e-30
        %v622 = vrsqrt.pop %v620
        %v623 = vsel %vm621, %v622, 0.0
        %v624 = vmul.f32 %v616, %v623
        %625 = vst.msk [vmem:[%s134 + $0x8] sm:$0x1] %vm139, %v624
        %v626 = vlaneseq
        %v627 = vshrl.u32 %v626, 7
        %v628 = vsub.s32 0, %v627
        %v629 = vrot.slane %v624, %v628
        %v630 = vmul.f32 %v629, %v616
        %v631 = vsel %vm153, %v630, 0.0
        %632 = vadd.xlane.f32.xlu0 %v631
        %v633 = vpop.xlane.xlu0 %632
        %v634 = vmul.f32 %v633, %v159
        %v635 = vmul.f32 %v634, %v629
        %v636 = vsub.f32 %v616, %v635
        %v637 = vmul.f32 %v636, %v636
        %v638 = vsel %vm164, %v637, 0.0
        %639 = vadd.xlane.f32.xlu0 %v638
        %v640 = vpop.xlane.xlu0 %639
        %vm641 = vcmp.gt.f32.partialorder %v640, 1e-30
        %v642 = vrsqrt.pop %v640
        %v643 = vsel %vm641, %v642, 0.0
        %v644 = vmul.f32 %v636, %v643
        %645 = vst.msk [vmem:[%s134 + $0x8] sm:$0x2] %vm164, %v644
        %v646 = vlaneseq
        %v647 = vshrl.u32 %v646, 7
        %v648 = vsub.s32 1, %v647
        %v649 = vrot.slane %v644, %v648
        %v650 = vmul.f32 %v649, %v636
        %v651 = vsel %vm153, %v650, 0.0
        %652 = vadd.xlane.f32.xlu0 %v651
        %v653 = vpop.xlane.xlu0 %652
        %v654 = vmul.f32 %v653, %v183
        %v655 = vmul.f32 %v654, %v649
        %v656 = vsub.f32 %v636, %v655
        %v657 = vmul.f32 %v656, %v656
        %v658 = vsel %vm188, %v657, 0.0
        %659 = vadd.xlane.f32.xlu0 %v658
        %v660 = vpop.xlane.xlu0 %659
        %vm661 = vcmp.gt.f32.partialorder %v660, 1e-30
        %v662 = vrsqrt.pop %v660
        %v663 = vsel %vm661, %v662, 0.0
        %v664 = vmul.f32 %v656, %v663
        %665 = vst.msk [vmem:[%s134 + $0x8] sm:$0x4] %vm188, %v664
        %v666 = vlaneseq
        %v667 = vshrl.u32 %v666, 7
        %v668 = vsub.s32 2, %v667
        %v669 = vrot.slane %v664, %v668
        %v670 = vmul.f32 %v669, %v656
        %v671 = vsel %vm153, %v670, 0.0
        %672 = vadd.xlane.f32.xlu0 %v671
        %v673 = vpop.xlane.xlu0 %672
        %v674 = vmul.f32 %v673, %v207
        %v675 = vmul.f32 %v674, %v669
        %v676 = vsub.f32 %v656, %v675
        %v677 = vmul.f32 %v676, %v676
        %v678 = vsel %vm212, %v677, 0.0
        %679 = vadd.xlane.f32.xlu0 %v678
        %v680 = vpop.xlane.xlu0 %679
        %vm681 = vcmp.gt.f32.partialorder %v680, 1e-30
        %v682 = vrsqrt.pop %v680
        %v683 = vsel %vm681, %v682, 0.0
        %v684 = vmul.f32 %v676, %v683
        %685 = vst.msk [vmem:[%s134 + $0x8] sm:$0x8] %vm212, %v684
        %v686 = vlaneseq
        %v687 = vshrl.u32 %v686, 7
        %v688 = vsub.s32 3, %v687
        %v689 = vrot.slane %v684, %v688
        %v690 = vmul.f32 %v689, %v676
        %v691 = vsel %vm153, %v690, 0.0
        %692 = vadd.xlane.f32.xlu0 %v691
        %v693 = vpop.xlane.xlu0 %692
        %v694 = vmul.f32 %v693, %v231
        %v695 = vmul.f32 %v694, %v689
        %v696 = vsub.f32 %v676, %v695
        %v697 = vmul.f32 %v696, %v696
        %v698 = vsel %vm236, %v697, 0.0
        %699 = vadd.xlane.f32.xlu0 %v698
        %v700 = vpop.xlane.xlu0 %699
        %vm701 = vcmp.gt.f32.partialorder %v700, 1e-30
        %v702 = vrsqrt.pop %v700
        %v703 = vsel %vm701, %v702, 0.0
        %v704 = vmul.f32 %v696, %v703
        %705 = vst.msk [vmem:[%s134 + $0x8] sm:$0x10] %vm236, %v704
        %v706 = vlaneseq
        %v707 = vshrl.u32 %v706, 7
        %v708 = vsub.s32 4, %v707
        %v709 = vrot.slane %v704, %v708
        %v710 = vmul.f32 %v709, %v696
        %v711 = vsel %vm153, %v710, 0.0
        %712 = vadd.xlane.f32.xlu0 %v711
        %v713 = vpop.xlane.xlu0 %712
        %v714 = vmul.f32 %v713, %v255
        %v715 = vmul.f32 %v714, %v709
        %v716 = vsub.f32 %v696, %v715
        %v717 = vmul.f32 %v716, %v716
        %v718 = vsel %vm260, %v717, 0.0
        %719 = vadd.xlane.f32.xlu0 %v718
        %v720 = vpop.xlane.xlu0 %719
        %vm721 = vcmp.gt.f32.partialorder %v720, 1e-30
        %v722 = vrsqrt.pop %v720
        %v723 = vsel %vm721, %v722, 0.0
        %v724 = vmul.f32 %v716, %v723
        %725 = vst.msk [vmem:[%s134 + $0x8] sm:$0x20] %vm260, %v724
        %v726 = vlaneseq
        %v727 = vshrl.u32 %v726, 7
        %v728 = vsub.s32 5, %v727
        %v729 = vrot.slane %v724, %v728
        %v730 = vmul.f32 %v729, %v716
        %v731 = vsel %vm153, %v730, 0.0
        %732 = vadd.xlane.f32.xlu0 %v731
        %v733 = vpop.xlane.xlu0 %732
        %v734 = vmul.f32 %v733, %v279
        %v735 = vmul.f32 %v734, %v729
        %v736 = vsub.f32 %v716, %v735
        %v737 = vmul.f32 %v736, %v736
        %v738 = vsel %vm284, %v737, 0.0
        %739 = vadd.xlane.f32.xlu0 %v738
        %v740 = vpop.xlane.xlu0 %739
        %vm741 = vcmp.gt.f32.partialorder %v740, 1e-30
        %v742 = vrsqrt.pop %v740
        %v743 = vsel %vm741, %v742, 0.0
        %v744 = vmul.f32 %v736, %v743
        %745 = vst.msk [vmem:[%s134 + $0x8] sm:$0x40] %vm284, %v744
        %v746 = vlaneseq
        %v747 = vshrl.u32 %v746, 7
        %v748 = vsub.s32 6, %v747
        %v749 = vrot.slane %v744, %v748
        %v750 = vmul.f32 %v749, %v736
        %v751 = vsel %vm153, %v750, 0.0
        %752 = vadd.xlane.f32.xlu0 %v751
        %v753 = vpop.xlane.xlu0 %752
        %v754 = vmul.f32 %v753, %v303
        %v755 = vmul.f32 %v754, %v749
        %v756 = vsub.f32 %v736, %v755
        %v757 = vmul.f32 %v756, %v756
        %v758 = vsel %vm308, %v757, 0.0
        %759 = vadd.xlane.f32.xlu0 %v758
        %v760 = vpop.xlane.xlu0 %759
        %vm761 = vcmp.gt.f32.partialorder %v760, 1e-30
        %v762 = vrsqrt.pop %v760
        %v763 = vsel %vm761, %v762, 0.0
        %v764 = vmul.f32 %v756, %v763
        %765 = vst.msk [vmem:[%s134 + $0x8] sm:$0x80] %vm308, %v764
        %s766 = sand.u32 %s52, 1
        %s767 = scalar_lea.sflag [#allocation4], %s766
        %s768 = sand.u32 %s52, 1
        %s769 = smul.addr %s768, 16
        %s770 = scalar_lea.vmem [#allocation5], %s769
        // Predicated region
        $region29: #{tpu_custom_call.1} parent=23 // pred_check
          %p771 = pneg %p62
        $region30: #{tpu_custom_call.1} parent=23 // pred_check_branch
          %773 = sbr.rel (%p771) target = $region32
        $region31: #{tpu_custom_call.1} parent=23 // pred_region
          %s775 = ssub.s32 256, 256
          %776 = vsyncadd %s767, %s775
          %s777 = smul.addr %s18, 2
          %s778 = smul.addr %s777, 128
          %s779 = scalar_lea.hbm %s1, %s778
          %s780 = sshll.u32 %s770, 4
          %s781 = int_to_ptr.vmem [resolvable:$true] %s780
          %786 = dma.vmem_to_hbm [thread:$0]  %s781, 256, %s779, %s767, 128, 128, 8
        $region32: #{tpu_custom_call.1} parent=23 // pred_fallthru
          _
      $region24: #{tpu_custom_call.1} parent=5 // pred_fallthru
        _
      %p787 = scmp.le.s32.totalorder 2, %s13
      // Predicated region
      $region33: #{tpu_custom_call.1} parent=5 // pred_check
        %p788 = pneg %p787
      $region34: #{tpu_custom_call.1} parent=5 // pred_check_branch
        %790 = sbr.rel (%p788) target = $region36
      $region35: #{tpu_custom_call.1} parent=5 // pred_region
        %s791 = ssub.s32 %s13, 2
        // Predicated region
        $region37: #{tpu_custom_call.1} parent=35 // pred_check
          %p792 = pneg %p68
        $region38: #{tpu_custom_call.1} parent=35 // pred_check_branch
          %794 = sbr.rel (%p792) target = $region40
        $region39: #{tpu_custom_call.1} parent=35 // pred_region
          %s795 = sand.u32 %s53, 1
          %s796 = scalar_lea.sflag [#allocation4], %s795
          %s797 = sand.u32 %s53, 1
          %s798 = smul.addr %s797, 16
          %s799 = scalar_lea.vmem [#allocation5], %s798
          %800 = dma.done %s796, 256
        $region40: #{tpu_custom_call.1} parent=35 // pred_fallthru
          _
      $region36: #{tpu_custom_call.1} parent=5 // pred_fallthru
        _
    $region6: #{tpu_custom_call.1} parent=1 // loop_footer
      %s17 = sadd.s32 1, %s13
    $region7: #{tpu_custom_call.1} parent=1 // loop_footer_branch
      %12 = sbr.rel target = $region3
    $region8: #{tpu_custom_call.1} parent=1 // loop_exit
      _
    %801 = vsyncpa [#allocation3], 1
    %s802 = scalar_lea.sflag [#allocation3], 1
    %803 = vsyncpa %s802, 1
    %804 = vsyncpa [#allocation4], 1
    %s805 = scalar_lea.sflag [#allocation4], 1
    %806 = vsyncpa %s805, 1

</llo_original>
